<compile_context>
chip_gen: v7x
topology: tpu7x:2x2x1
jax: 0.10.0
libtpu: 0.0.40
codegen_flags: <defaults>
</compile_context>

<pallas_src>
import functools

import jax
import jax.numpy as jnp
from jax import lax
from jax.experimental import pallas as pl
from jax.experimental.pallas import tpu as pltpu


_VMEM_LIMIT_BYTES = 48 * 1024 * 1024  # fits v7x (64 MiB physical) with headroom


def _cparams(semantics):
    return pltpu.CompilerParams(dimension_semantics=semantics,
                                vmem_limit_bytes=_VMEM_LIMIT_BYTES)


# ---------------------------------------------------------------------------
# Kernel 1: fully fused conv backbone (conv+ReLU stacks, MaxPool1d per group,
#           global average pool) in a single pallas_call over the batch grid.
# ---------------------------------------------------------------------------
def _backbone_kernel(x_ref, *refs, plan):
    out_ref = refs[-1]
    prm = refs[:-1]

    h = x_ref[0]                      # (C_in, L) bf16, resident in VMEM
    idx = 0
    pooled_f32 = None
    for grp in plan:
        # --- num_conv x (Conv1d valid/stride1 + bias + ReLU), taps folded into one dot
        acc = None
        for (c_in, c_out, k) in grp["layers"]:
            l_out = h.shape[-1] - k + 1
            w = prm[idx][...]         # (c_out, k*c_in) bf16 (resident)
            b = prm[idx + 1][...]     # (c_out, 1)      f32  (resident)
            idx += 2
            if k == 1:
                slab = h
            else:
                # in-VMEM im2col slab; rows ordered tap-major (wi*c_in + c)
                slab = jnp.concatenate(
                    [h[:, wi:wi + l_out] for wi in range(k)], axis=0)
            acc = jnp.dot(w, slab, preferred_element_type=jnp.float32)   # single MXU pass
            acc = jnp.maximum(acc + b, 0.0)                              # bias + ReLU
            h = acc.astype(jnp.bfloat16)

        # --- fused MaxPool1d(mpk, mps): stride-1 windowed max via log2 doubling,
        #     then strided subsample as one bf16 one-hot matmul (selector precomputed).
        mpk, mps = grp["pool"]
        cur = acc                                     # f32 (c_out, l_out)
        width = 1
        while width < mpk:
            s = min(width, mpk - width)
            n = cur.shape[-1]
            cur = jnp.maximum(cur[:, : n - s], cur[:, s:])
            width += s
        sel = prm[idx][...]                           # (lw, p) bf16 exact 0/1, resident
        idx += 1
        pooled_f32 = jnp.dot(cur.astype(jnp.bfloat16), sel,
                             preferred_element_type=jnp.float32)         # (c_out, p)
        h = pooled_f32.astype(jnp.bfloat16)

    # --- global average pool fused here: emit feat directly (no (B,C,L) HBM writeback)
    out_ref[0] = jnp.mean(pooled_f32, axis=-1, keepdims=True).astype(out_ref.dtype)


def backbone_forward(backbone_ops, x, *, plan):
    B, C_in, L = x.shape
    c_feat = plan[-1]["layers"][-1][1]
    x_b = x.astype(jnp.bfloat16)                      # bf16 MXU operand

    in_specs = [pl.BlockSpec((1, C_in, L), lambda bi: (bi, 0, 0))]
    for a in backbone_ops:                            # weights/biases/selectors: resident
        in_specs.append(pl.BlockSpec(tuple(a.shape), lambda bi: (0, 0)))

    out = pl.pallas_call(
        functools.partial(_backbone_kernel, plan=plan),
        out_shape=jax.ShapeDtypeStruct((B, c_feat, 1), jnp.float32),
        grid=(B,),
        in_specs=in_specs,
        out_specs=pl.BlockSpec((1, c_feat, 1), lambda bi: (bi, 0, 0)),
        compiler_params=_cparams(("parallel",)),
    )(x_b, *backbone_ops)
    return out.reshape(B, c_feat)                     # feat (B, C_feat), f32


# ---------------------------------------------------------------------------
# Kernel 2: all classifier heads (num_fc stacked Linear(+ReLU)) in one call
# ---------------------------------------------------------------------------
def _heads_kernel(feat_ref, *refs, num_fc):
    out_ref = refs[-1]
    wb = refs[:-1]
    z = feat_ref[...].astype(jnp.bfloat16)            # (B, C), feat resident across heads
    for i in range(num_fc):
        w = wb[2 * i][0]                              # (d_in, d_out) bf16
        bia = wb[2 * i + 1][0]                        # (1, d_out)    f32
        z = jnp.dot(z, w, preferred_element_type=jnp.float32) + bia
        if i < num_fc - 1:
            z = jnp.maximum(z, 0.0).astype(jnp.bfloat16)
            # TODO(synk): nn.Dropout is inference-mode identity here.
    out_ref[0] = z.astype(out_ref.dtype)


def heads_forward(head_ops, feat, *, n_heads, num_fc, num_class):
    B, C = feat.shape
    in_specs = [pl.BlockSpec((B, C), lambda hd: (0, 0))]
    for a in head_ops:
        in_specs.append(pl.BlockSpec((1,) + tuple(a.shape[1:]), lambda hd: (hd, 0, 0)))

    return pl.pallas_call(
        functools.partial(_heads_kernel, num_fc=num_fc),
        out_shape=jax.ShapeDtypeStruct((n_heads, B, num_class), jnp.float32),
        grid=(n_heads,),
        in_specs=in_specs,
        out_specs=pl.BlockSpec((1, B, num_class), lambda hd: (hd, 0, 0)),
        compiler_params=_cparams(("parallel",)),
    )(feat, *head_ops)


# ---------------------------------------------------------------------------
# Parameters, one-time preprocessing, forward
# ---------------------------------------------------------------------------
def init_params(key, in_channels, conv_groups, num_conv, hidden, num_fc,
                num_trans, num_class=2):
    params = {"backbone": [], "heads": []}
    c_prev = in_channels
    for (c_out, ksz) in conv_groups:
        group = []
        for _ in range(num_conv):
            key, k1, k2 = jax.random.split(key, 3)
            fan_in = c_prev * ksz
            w = jax.random.normal(k1, (c_out, c_prev, ksz), jnp.float32) / jnp.sqrt(fan_in)
            b = 0.01 * jax.random.normal(k2, (c_out,), jnp.float32)
            group.append((w, b))
            c_prev = c_out
        params["backbone"].append(group)

    feat_dim = conv_groups[-1][0]
    dims = [feat_dim] + [hidden] * (num_fc - 1) + [num_class]
    for _ in range(num_trans + 1):
        layers = []
        for i in range(num_fc):
            key, k1, k2 = jax.random.split(key, 3)
            w = jax.random.normal(k1, (dims[i], dims[i + 1]), jnp.float32) / jnp.sqrt(dims[i])
            b = 0.01 * jax.random.normal(k2, (dims[i + 1],), jnp.float32)
            layers.append((w, b))
        params["heads"].append(layers)
    return params


def prepare_params(params, *, input_len, mpkernel, mpstride):
    """One-time parameter preprocessing (hoisted out of the jitted forward path)."""
    backbone_ops, plan = [], []
    L = input_len
    for group in params["backbone"]:
        layers_meta = []
        for (w, b) in group:
            c_out, c_in, k = w.shape
            # slab row order is wi*c_in + c  ->  W2[o, wi*c_in + c] = w[o, c, wi]
            w2 = jnp.transpose(w, (0, 2, 1)).reshape(c_out, k * c_in).astype(jnp.bfloat16)
            b2 = b.reshape(c_out, 1).astype(jnp.float32)
            backbone_ops += [w2, b2]
            layers_meta.append((c_in, c_out, k))
            L = L - k + 1
        lw = L - mpkernel + 1
        p = (L - mpkernel) // mpstride + 1
        assert lw >= 1 and p >= 1, (L, mpkernel, mpstride)
        rows = jnp.arange(lw)[:, None]
        cols = jnp.arange(p)[None, :]
        sel = (rows == cols * mpstride).astype(jnp.bfloat16)   # exact 0/1 column picker
        backbone_ops.append(sel)
        plan.append({"layers": tuple(layers_meta), "pool": (mpkernel, mpstride)})
        L = p

    n_heads = len(params["heads"])
    num_fc = len(params["heads"][0])
    num_class = params["heads"][0][-1][0].shape[1]
    head_ops = []
    for i in range(num_fc):
        w_i = jnp.stack([params["heads"][h][i][0]
                         for h in range(n_heads)]).astype(jnp.bfloat16)
        b_i = jnp.stack([params["heads"][h][i][1].reshape(1, -1)
                         for h in range(n_heads)]).astype(jnp.float32)
        head_ops += [w_i, b_i]

    prep = {"backbone_ops": backbone_ops, "head_ops": head_ops}
    meta = {"plan": tuple(plan), "n_heads": n_heads, "num_fc": num_fc,
            "num_class": num_class}
    return prep, meta


def ssl_conv_pred_forward(prep, x, *, meta):
    feat = backbone_forward(prep["backbone_ops"], x, plan=meta["plan"])
    return heads_forward(prep["head_ops"], feat, n_heads=meta["n_heads"],
                         num_fc=meta["num_fc"], num_class=meta["num_class"])


# ---------------------------------------------------------------------------
# Pure-JAX reference (f32) for a numerical sanity check
# ---------------------------------------------------------------------------
def _ref_forward(params, x, *, mpkernel, mpstride):
    h = x
    for group in params["backbone"]:
        for (w, b) in group:
            k = w.shape[-1]
            L_out = h.shape[-1] - k + 1
            acc = b[None, :, None] + sum(
                jnp.einsum("oc,bcl->bol", w[:, :, i], h[:, :, i:i + L_out])
                for i in range(k))
            h = jnp.maximum(acc, 0.0)
        h = lax.reduce_window(h, -jnp.inf, lax.max,
                              (1, 1, mpkernel), (1, 1, mpstride), "VALID")
    feat = jnp.mean(h, axis=-1)
    outs = []
    for layers in params["heads"]:
        z = feat
        for i, (w, b) in enumerate(layers):
            z = z @ w + b
            if i < len(layers) - 1:
                z = jnp.maximum(z, 0.0)
        outs.append(z)
    return jnp.stack(outs, axis=0)


# ---------------------------------------------------------------------------
if __name__ == "__main__":
    # Small configuration consistent with the module (hyper-params shrunk for a quick demo).
    conv_groups = [(8, 5), (16, 3)]     # (out_channels, kernel_size) per group
    num_conv, mpkernel, mpstride = 2, 4, 2
    hidden, num_fc, num_trans = 32, 2, 2
    B, C_in, L = 2, 1, 64

    key = jax.random.PRNGKey(0)
    key, xk = jax.random.split(key)
    x = jax.random.normal(xk, (B, C_in, L), jnp.float32)
    params = init_params(key, C_in, conv_groups, num_conv, hidden, num_fc, num_trans)

    prep, meta = prepare_params(params, input_len=L,
                                mpkernel=mpkernel, mpstride=mpstride)

    fwd = jax.jit(functools.partial(ssl_conv_pred_forward, meta=meta))
    out = jax.block_until_ready(fwd(prep, x))

    assert out.shape == (num_trans + 1, B, 2), out.shape
    assert bool(jnp.all(jnp.isfinite(out)))

    ref = _ref_forward(params, x, mpkernel=mpkernel, mpstride=mpstride)
    assert bool(jnp.allclose(out, ref, atol=0.1, rtol=0.1)), (out, ref)  # bf16 operand tolerance

    print("KERNEL_OK")
</pallas_src>

<mosaic_0001>
module attributes {stable_mosaic.version = 11 : i64} {
  func.func @_backbone_kernel(%arg0: i32, %arg1: memref<1x1x64xbf16, #tpu.memory_space<vmem>>, %arg2: memref<8x5xbf16, #tpu.memory_space<vmem>>, %arg3: memref<8x1xf32, #tpu.memory_space<vmem>>, %arg4: memref<8x40xbf16, #tpu.memory_space<vmem>>, %arg5: memref<8x1xf32, #tpu.memory_space<vmem>>, %arg6: memref<53x27xbf16, #tpu.memory_space<vmem>>, %arg7: memref<16x24xbf16, #tpu.memory_space<vmem>>, %arg8: memref<16x1xf32, #tpu.memory_space<vmem>>, %arg9: memref<16x48xbf16, #tpu.memory_space<vmem>>, %arg10: memref<16x1xf32, #tpu.memory_space<vmem>>, %arg11: memref<20x10xbf16, #tpu.memory_space<vmem>>, %arg12: memref<1x16x1xf32, #tpu.memory_space<vmem>>) attributes {dimension_semantics = [#tpu.dimension_semantics<parallel>], iteration_bounds = array<i64: 2>, scalar_prefetch = 0 : i64, scratch_operands = 0 : i64, tpu.core_type = #tpu.core_type<tc>, window_params = [{transform_indices = @transform_0, window_bounds = array<i64: 1, 1, 64>}, {pipeline_mode = #tpu.pipeline_mode<synchronous>, transform_indices = @transform_1, window_bounds = array<i64: 8, 5>}, {pipeline_mode = #tpu.pipeline_mode<synchronous>, transform_indices = @transform_2, window_bounds = array<i64: 8, 1>}, {pipeline_mode = #tpu.pipeline_mode<synchronous>, transform_indices = @transform_3, window_bounds = array<i64: 8, 40>}, {pipeline_mode = #tpu.pipeline_mode<synchronous>, transform_indices = @transform_4, window_bounds = array<i64: 8, 1>}, {pipeline_mode = #tpu.pipeline_mode<synchronous>, transform_indices = @transform_5, window_bounds = array<i64: 53, 27>}, {pipeline_mode = #tpu.pipeline_mode<synchronous>, transform_indices = @transform_6, window_bounds = array<i64: 16, 24>}, {pipeline_mode = #tpu.pipeline_mode<synchronous>, transform_indices = @transform_7, window_bounds = array<i64: 16, 1>}, {pipeline_mode = #tpu.pipeline_mode<synchronous>, transform_indices = @transform_8, window_bounds = array<i64: 16, 48>}, {pipeline_mode = #tpu.pipeline_mode<synchronous>, transform_indices = @transform_9, window_bounds = array<i64: 16, 1>}, {pipeline_mode = #tpu.pipeline_mode<synchronous>, transform_indices = @transform_10, window_bounds = array<i64: 20, 10>}, {transform_indices = @transform_11, window_bounds = array<i64: 1, 16, 1>}]} {
    %c0 = arith.constant 0 : index
    %c0_0 = arith.constant 0 : index
    %c0_1 = arith.constant 0 : index
    %0 = vector.load %arg1[%c0, %c0_0, %c0_1] : memref<1x1x64xbf16, #tpu.memory_space<vmem>>, vector<1x1x64xbf16>
    %1 = vector.shape_cast %0 : vector<1x1x64xbf16> to vector<1x64xbf16>
    %c0_2 = arith.constant 0 : index
    %c0_3 = arith.constant 0 : index
    %2 = vector.load %arg2[%c0_2, %c0_3] : memref<8x5xbf16, #tpu.memory_space<vmem>>, vector<8x5xbf16>
    %c0_4 = arith.constant 0 : index
    %c0_5 = arith.constant 0 : index
    %3 = vector.load %arg3[%c0_4, %c0_5] : memref<8x1xf32, #tpu.memory_space<vmem>>, vector<8x1xf32>
    %4 = vector.extract_strided_slice %1 {offsets = [0, 0], sizes = [1, 60], strides = [1, 1]} : vector<1x64xbf16> to vector<1x60xbf16>
    %5 = vector.extract_strided_slice %1 {offsets = [0, 1], sizes = [1, 60], strides = [1, 1]} : vector<1x64xbf16> to vector<1x60xbf16>
    %6 = vector.extract_strided_slice %1 {offsets = [0, 2], sizes = [1, 60], strides = [1, 1]} : vector<1x64xbf16> to vector<1x60xbf16>
    %7 = vector.extract_strided_slice %1 {offsets = [0, 3], sizes = [1, 60], strides = [1, 1]} : vector<1x64xbf16> to vector<1x60xbf16>
    %8 = vector.extract_strided_slice %1 {offsets = [0, 4], sizes = [1, 60], strides = [1, 1]} : vector<1x64xbf16> to vector<1x60xbf16>
    %9 = tpu.concatenate %4, %5, %6, %7, %8 in 0 : vector<1x60xbf16>, vector<1x60xbf16>, vector<1x60xbf16>, vector<1x60xbf16>, vector<1x60xbf16> -> vector<5x60xbf16>
    %cst = arith.constant dense<0.000000e+00> : vector<8x60xf32>
    %10 = tpu.matmul %2, %9, %cst {dimension_numbers = #tpu.dot_dimension_numbers<[1], [0], [0], [1], [0, 0, 1, 1], [], []>} : vector<8x5xbf16>, vector<5x60xbf16>, vector<8x60xf32> -> vector<8x60xf32>
    %11 = vector.broadcast %3 : vector<8x1xf32> to vector<8x60xf32>
    %12 = arith.addf %10, %11 : vector<8x60xf32>
    %cst_6 = arith.constant 0.000000e+00 : f32
    %13 = vector.broadcast %cst_6 : f32 to vector<8x60xf32>
    %14 = arith.maximumf %12, %13 : vector<8x60xf32>
    %15 = arith.truncf %14 : vector<8x60xf32> to vector<8x60xbf16>
    %c0_7 = arith.constant 0 : index
    %c0_8 = arith.constant 0 : index
    %16 = vector.load %arg4[%c0_7, %c0_8] : memref<8x40xbf16, #tpu.memory_space<vmem>>, vector<8x40xbf16>
    %c0_9 = arith.constant 0 : index
    %c0_10 = arith.constant 0 : index
    %17 = vector.load %arg5[%c0_9, %c0_10] : memref<8x1xf32, #tpu.memory_space<vmem>>, vector<8x1xf32>
    %18 = vector.extract_strided_slice %15 {offsets = [0, 0], sizes = [8, 56], strides = [1, 1]} : vector<8x60xbf16> to vector<8x56xbf16>
    %19 = vector.extract_strided_slice %15 {offsets = [0, 1], sizes = [8, 56], strides = [1, 1]} : vector<8x60xbf16> to vector<8x56xbf16>
    %20 = vector.extract_strided_slice %15 {offsets = [0, 2], sizes = [8, 56], strides = [1, 1]} : vector<8x60xbf16> to vector<8x56xbf16>
    %21 = vector.extract_strided_slice %15 {offsets = [0, 3], sizes = [8, 56], strides = [1, 1]} : vector<8x60xbf16> to vector<8x56xbf16>
    %22 = vector.extract_strided_slice %15 {offsets = [0, 4], sizes = [8, 56], strides = [1, 1]} : vector<8x60xbf16> to vector<8x56xbf16>
    %23 = tpu.concatenate %18, %19, %20, %21, %22 in 0 : vector<8x56xbf16>, vector<8x56xbf16>, vector<8x56xbf16>, vector<8x56xbf16>, vector<8x56xbf16> -> vector<40x56xbf16>
    %cst_11 = arith.constant dense<0.000000e+00> : vector<8x56xf32>
    %24 = tpu.matmul %16, %23, %cst_11 {dimension_numbers = #tpu.dot_dimension_numbers<[1], [0], [0], [1], [0, 0, 1, 1], [], []>} : vector<8x40xbf16>, vector<40x56xbf16>, vector<8x56xf32> -> vector<8x56xf32>
    %25 = vector.broadcast %17 : vector<8x1xf32> to vector<8x56xf32>
    %26 = arith.addf %24, %25 : vector<8x56xf32>
    %cst_12 = arith.constant 0.000000e+00 : f32
    %27 = vector.broadcast %cst_12 : f32 to vector<8x56xf32>
    %28 = arith.maximumf %26, %27 : vector<8x56xf32>
    %29 = vector.extract_strided_slice %28 {offsets = [0, 0], sizes = [8, 55], strides = [1, 1]} : vector<8x56xf32> to vector<8x55xf32>
    %30 = vector.extract_strided_slice %28 {offsets = [0, 1], sizes = [8, 55], strides = [1, 1]} : vector<8x56xf32> to vector<8x55xf32>
    %31 = arith.maximumf %29, %30 : vector<8x55xf32>
    %32 = vector.extract_strided_slice %31 {offsets = [0, 0], sizes = [8, 53], strides = [1, 1]} : vector<8x55xf32> to vector<8x53xf32>
    %33 = vector.extract_strided_slice %31 {offsets = [0, 2], sizes = [8, 53], strides = [1, 1]} : vector<8x55xf32> to vector<8x53xf32>
    %34 = arith.maximumf %32, %33 : vector<8x53xf32>
    %c0_13 = arith.constant 0 : index
    %c0_14 = arith.constant 0 : index
    %35 = vector.load %arg6[%c0_13, %c0_14] : memref<53x27xbf16, #tpu.memory_space<vmem>>, vector<53x27xbf16>
    %36 = arith.truncf %34 : vector<8x53xf32> to vector<8x53xbf16>
    %cst_15 = arith.constant dense<0.000000e+00> : vector<8x27xf32>
    %37 = tpu.matmul %36, %35, %cst_15 {dimension_numbers = #tpu.dot_dimension_numbers<[1], [0], [0], [1], [0, 0, 1, 1], [], []>} : vector<8x53xbf16>, vector<53x27xbf16>, vector<8x27xf32> -> vector<8x27xf32>
    %38 = arith.truncf %37 : vector<8x27xf32> to vector<8x27xbf16>
    %c0_16 = arith.constant 0 : index
    %c0_17 = arith.constant 0 : index
    %39 = vector.load %arg7[%c0_16, %c0_17] : memref<16x24xbf16, #tpu.memory_space<vmem>>, vector<16x24xbf16>
    %c0_18 = arith.constant 0 : index
    %c0_19 = arith.constant 0 : index
    %40 = vector.load %arg8[%c0_18, %c0_19] : memref<16x1xf32, #tpu.memory_space<vmem>>, vector<16x1xf32>
    %41 = vector.extract_strided_slice %38 {offsets = [0, 0], sizes = [8, 25], strides = [1, 1]} : vector<8x27xbf16> to vector<8x25xbf16>
    %42 = vector.extract_strided_slice %38 {offsets = [0, 1], sizes = [8, 25], strides = [1, 1]} : vector<8x27xbf16> to vector<8x25xbf16>
    %43 = vector.extract_strided_slice %38 {offsets = [0, 2], sizes = [8, 25], strides = [1, 1]} : vector<8x27xbf16> to vector<8x25xbf16>
    %44 = tpu.concatenate %41, %42, %43 in 0 : vector<8x25xbf16>, vector<8x25xbf16>, vector<8x25xbf16> -> vector<24x25xbf16>
    %cst_20 = arith.constant dense<0.000000e+00> : vector<16x25xf32>
    %45 = tpu.matmul %39, %44, %cst_20 {dimension_numbers = #tpu.dot_dimension_numbers<[1], [0], [0], [1], [0, 0, 1, 1], [], []>} : vector<16x24xbf16>, vector<24x25xbf16>, vector<16x25xf32> -> vector<16x25xf32>
    %46 = vector.broadcast %40 : vector<16x1xf32> to vector<16x25xf32>
    %47 = arith.addf %45, %46 : vector<16x25xf32>
    %cst_21 = arith.constant 0.000000e+00 : f32
    %48 = vector.broadcast %cst_21 : f32 to vector<16x25xf32>
    %49 = arith.maximumf %47, %48 : vector<16x25xf32>
    %50 = arith.truncf %49 : vector<16x25xf32> to vector<16x25xbf16>
    %c0_22 = arith.constant 0 : index
    %c0_23 = arith.constant 0 : index
    %51 = vector.load %arg9[%c0_22, %c0_23] : memref<16x48xbf16, #tpu.memory_space<vmem>>, vector<16x48xbf16>
    %c0_24 = arith.constant 0 : index
    %c0_25 = arith.constant 0 : index
    %52 = vector.load %arg10[%c0_24, %c0_25] : memref<16x1xf32, #tpu.memory_space<vmem>>, vector<16x1xf32>
    %53 = vector.extract_strided_slice %50 {offsets = [0, 0], sizes = [16, 23], strides = [1, 1]} : vector<16x25xbf16> to vector<16x23xbf16>
    %54 = vector.extract_strided_slice %50 {offsets = [0, 1], sizes = [16, 23], strides = [1, 1]} : vector<16x25xbf16> to vector<16x23xbf16>
    %55 = vector.extract_strided_slice %50 {offsets = [0, 2], sizes = [16, 23], strides = [1, 1]} : vector<16x25xbf16> to vector<16x23xbf16>
    %56 = tpu.concatenate %53, %54, %55 in 0 : vector<16x23xbf16>, vector<16x23xbf16>, vector<16x23xbf16> -> vector<48x23xbf16>
    %cst_26 = arith.constant dense<0.000000e+00> : vector<16x23xf32>
    %57 = tpu.matmul %51, %56, %cst_26 {dimension_numbers = #tpu.dot_dimension_numbers<[1], [0], [0], [1], [0, 0, 1, 1], [], []>} : vector<16x48xbf16>, vector<48x23xbf16>, vector<16x23xf32> -> vector<16x23xf32>
    %58 = vector.broadcast %52 : vector<16x1xf32> to vector<16x23xf32>
    %59 = arith.addf %57, %58 : vector<16x23xf32>
    %cst_27 = arith.constant 0.000000e+00 : f32
    %60 = vector.broadcast %cst_27 : f32 to vector<16x23xf32>
    %61 = arith.maximumf %59, %60 : vector<16x23xf32>
    %62 = vector.extract_strided_slice %61 {offsets = [0, 0], sizes = [16, 22], strides = [1, 1]} : vector<16x23xf32> to vector<16x22xf32>
    %63 = vector.extract_strided_slice %61 {offsets = [0, 1], sizes = [16, 22], strides = [1, 1]} : vector<16x23xf32> to vector<16x22xf32>
    %64 = arith.maximumf %62, %63 : vector<16x22xf32>
    %65 = vector.extract_strided_slice %64 {offsets = [0, 0], sizes = [16, 20], strides = [1, 1]} : vector<16x22xf32> to vector<16x20xf32>
    %66 = vector.extract_strided_slice %64 {offsets = [0, 2], sizes = [16, 20], strides = [1, 1]} : vector<16x22xf32> to vector<16x20xf32>
    %67 = arith.maximumf %65, %66 : vector<16x20xf32>
    %c0_28 = arith.constant 0 : index
    %c0_29 = arith.constant 0 : index
    %68 = vector.load %arg11[%c0_28, %c0_29] : memref<20x10xbf16, #tpu.memory_space<vmem>>, vector<20x10xbf16>
    %69 = arith.truncf %67 : vector<16x20xf32> to vector<16x20xbf16>
    %cst_30 = arith.constant dense<0.000000e+00> : vector<16x10xf32>
    %70 = tpu.matmul %69, %68, %cst_30 {dimension_numbers = #tpu.dot_dimension_numbers<[1], [0], [0], [1], [0, 0, 1, 1], [], []>} : vector<16x20xbf16>, vector<20x10xbf16>, vector<16x10xf32> -> vector<16x10xf32>
    %cst_31 = arith.constant dense<0.000000e+00> : vector<16xf32>
    %71 = vector.multi_reduction <add>, %70, %cst_31 [1] : vector<16x10xf32> to vector<16xf32>
    %72 = vector.shape_cast %71 : vector<16xf32> to vector<16x1xf32>
    %cst_32 = arith.constant 1.000000e+01 : f32
    %73 = vector.broadcast %cst_32 : f32 to vector<16x1xf32>
    %74 = arith.divf %72, %73 : vector<16x1xf32>
    %c0_33 = arith.constant 0 : index
    %c0_34 = arith.constant 0 : index
    %c0_35 = arith.constant 0 : index
    %75 = vector.load %arg12[%c0_33, %c0_34, %c0_35] : memref<1x16x1xf32, #tpu.memory_space<vmem>>, vector<1x16x1xf32>
    %76 = vector.shape_cast %75 : vector<1x16x1xf32> to vector<16x1xf32>
    %77 = vector.shape_cast %74 : vector<16x1xf32> to vector<1x16x1xf32>
    tpu.vector_store %arg12[%c0_33, %c0_34, %c0_35], %77 {strides = array<i32>} : memref<1x16x1xf32, #tpu.memory_space<vmem>>, vector<1x16x1xf32>,
    return
  }
  func.func @transform_0(%arg0: i32) -> (i32, i32, i32) {
    %c0_i32 = arith.constant 0 : i32
    %c0_i32_0 = arith.constant 0 : i32
    %c0_i32_1 = arith.constant 0 : i32
    return %arg0, %c0_i32, %c0_i32_0 : i32, i32, i32
  }
  func.func @transform_1(%arg0: i32) -> (i32, i32) {
    %c0_i32 = arith.constant 0 : i32
    %c0_i32_0 = arith.constant 0 : i32
    %c0_i32_1 = arith.constant 0 : i32
    return %c0_i32, %c0_i32_0 : i32, i32
  }
  func.func @transform_2(%arg0: i32) -> (i32, i32) {
    %c0_i32 = arith.constant 0 : i32
    %c0_i32_0 = arith.constant 0 : i32
    %c0_i32_1 = arith.constant 0 : i32
    return %c0_i32, %c0_i32_0 : i32, i32
  }
  func.func @transform_3(%arg0: i32) -> (i32, i32) {
    %c0_i32 = arith.constant 0 : i32
    %c0_i32_0 = arith.constant 0 : i32
    %c0_i32_1 = arith.constant 0 : i32
    return %c0_i32, %c0_i32_0 : i32, i32
  }
  func.func @transform_4(%arg0: i32) -> (i32, i32) {
    %c0_i32 = arith.constant 0 : i32
    %c0_i32_0 = arith.constant 0 : i32
    %c0_i32_1 = arith.constant 0 : i32
    return %c0_i32, %c0_i32_0 : i32, i32
  }
  func.func @transform_5(%arg0: i32) -> (i32, i32) {
    %c0_i32 = arith.constant 0 : i32
    %c0_i32_0 = arith.constant 0 : i32
    %c0_i32_1 = arith.constant 0 : i32
    return %c0_i32, %c0_i32_0 : i32, i32
  }
  func.func @transform_6(%arg0: i32) -> (i32, i32) {
    %c0_i32 = arith.constant 0 : i32
    %c0_i32_0 = arith.constant 0 : i32
    %c0_i32_1 = arith.constant 0 : i32
    return %c0_i32, %c0_i32_0 : i32, i32
  }
  func.func @transform_7(%arg0: i32) -> (i32, i32) {
    %c0_i32 = arith.constant 0 : i32
    %c0_i32_0 = arith.constant 0 : i32
    %c0_i32_1 = arith.constant 0 : i32
    return %c0_i32, %c0_i32_0 : i32, i32
  }
  func.func @transform_8(%arg0: i32) -> (i32, i32) {
    %c0_i32 = arith.constant 0 : i32
    %c0_i32_0 = arith.constant 0 : i32
    %c0_i32_1 = arith.constant 0 : i32
    return %c0_i32, %c0_i32_0 : i32, i32
  }
  func.func @transform_9(%arg0: i32) -> (i32, i32) {
    %c0_i32 = arith.constant 0 : i32
    %c0_i32_0 = arith.constant 0 : i32
    %c0_i32_1 = arith.constant 0 : i32
    return %c0_i32, %c0_i32_0 : i32, i32
  }
  func.func @transform_10(%arg0: i32) -> (i32, i32) {
    %c0_i32 = arith.constant 0 : i32
    %c0_i32_0 = arith.constant 0 : i32
    %c0_i32_1 = arith.constant 0 : i32
    return %c0_i32, %c0_i32_0 : i32, i32
  }
  func.func @transform_11(%arg0: i32) -> (i32, i32, i32) {
    %c0_i32 = arith.constant 0 : i32
    %c0_i32_0 = arith.constant 0 : i32
    %c0_i32_1 = arith.constant 0 : i32
    return %arg0, %c0_i32, %c0_i32_0 : i32, i32, i32
  }
}

module attributes {stable_mosaic.version = 11 : i64} {
  func.func @_heads_kernel(%arg0: i32, %arg1: memref<2x16xf32, #tpu.memory_space<vmem>>, %arg2: memref<1x16x32xbf16, #tpu.memory_space<vmem>>, %arg3: memref<1x1x32xf32, #tpu.memory_space<vmem>>, %arg4: memref<1x32x2xbf16, #tpu.memory_space<vmem>>, %arg5: memref<1x1x2xf32, #tpu.memory_space<vmem>>, %arg6: memref<1x2x2xf32, #tpu.memory_space<vmem>>) attributes {dimension_semantics = [#tpu.dimension_semantics<parallel>], iteration_bounds = array<i64: 3>, scalar_prefetch = 0 : i64, scratch_operands = 0 : i64, tpu.core_type = #tpu.core_type<tc>, window_params = [{pipeline_mode = #tpu.pipeline_mode<synchronous>, transform_indices = @transform_0, window_bounds = array<i64: 2, 16>}, {transform_indices = @transform_1, window_bounds = array<i64: 1, 16, 32>}, {transform_indices = @transform_2, window_bounds = array<i64: 1, 1, 32>}, {transform_indices = @transform_3, window_bounds = array<i64: 1, 32, 2>}, {transform_indices = @transform_4, window_bounds = array<i64: 1, 1, 2>}, {transform_indices = @transform_5, window_bounds = array<i64: 1, 2, 2>}]} {
    %c0 = arith.constant 0 : index
    %c0_0 = arith.constant 0 : index
    %0 = vector.load %arg1[%c0, %c0_0] : memref<2x16xf32, #tpu.memory_space<vmem>>, vector<2x16xf32>
    %1 = arith.truncf %0 : vector<2x16xf32> to vector<2x16xbf16>
    %c0_1 = arith.constant 0 : index
    %c0_2 = arith.constant 0 : index
    %c0_3 = arith.constant 0 : index
    %2 = vector.load %arg2[%c0_1, %c0_2, %c0_3] : memref<1x16x32xbf16, #tpu.memory_space<vmem>>, vector<1x16x32xbf16>
    %3 = vector.shape_cast %2 : vector<1x16x32xbf16> to vector<16x32xbf16>
    %c0_4 = arith.constant 0 : index
    %c0_5 = arith.constant 0 : index
    %c0_6 = arith.constant 0 : index
    %4 = vector.load %arg3[%c0_4, %c0_5, %c0_6] : memref<1x1x32xf32, #tpu.memory_space<vmem>>, vector<1x1x32xf32>
    %5 = vector.shape_cast %4 : vector<1x1x32xf32> to vector<1x32xf32>
    %cst = arith.constant dense<0.000000e+00> : vector<2x32xf32>
    %6 = tpu.matmul %1, %3, %cst {dimension_numbers = #tpu.dot_dimension_numbers<[1], [0], [0], [1], [0, 0, 1, 1], [], []>} : vector<2x16xbf16>, vector<16x32xbf16>, vector<2x32xf32> -> vector<2x32xf32>
    %7 = vector.broadcast %5 : vector<1x32xf32> to vector<2x32xf32>
    %8 = arith.addf %6, %7 : vector<2x32xf32>
    %cst_7 = arith.constant 0.000000e+00 : f32
    %9 = vector.broadcast %cst_7 : f32 to vector<2x32xf32>
    %10 = arith.maximumf %8, %9 : vector<2x32xf32>
    %11 = arith.truncf %10 : vector<2x32xf32> to vector<2x32xbf16>
    %c0_8 = arith.constant 0 : index
    %c0_9 = arith.constant 0 : index
    %c0_10 = arith.constant 0 : index
    %12 = vector.load %arg4[%c0_8, %c0_9, %c0_10] : memref<1x32x2xbf16, #tpu.memory_space<vmem>>, vector<1x32x2xbf16>
    %13 = vector.shape_cast %12 : vector<1x32x2xbf16> to vector<32x2xbf16>
    %c0_11 = arith.constant 0 : index
    %c0_12 = arith.constant 0 : index
    %c0_13 = arith.constant 0 : index
    %14 = vector.load %arg5[%c0_11, %c0_12, %c0_13] : memref<1x1x2xf32, #tpu.memory_space<vmem>>, vector<1x1x2xf32>
    %15 = vector.shape_cast %14 : vector<1x1x2xf32> to vector<1x2xf32>
    %cst_14 = arith.constant dense<0.000000e+00> : vector<2x2xf32>
    %16 = tpu.matmul %11, %13, %cst_14 {dimension_numbers = #tpu.dot_dimension_numbers<[1], [0], [0], [1], [0, 0, 1, 1], [], []>} : vector<2x32xbf16>, vector<32x2xbf16>, vector<2x2xf32> -> vector<2x2xf32>
    %17 = vector.broadcast %15 : vector<1x2xf32> to vector<2x2xf32>
    %18 = arith.addf %16, %17 : vector<2x2xf32>
    %c0_15 = arith.constant 0 : index
    %c0_16 = arith.constant 0 : index
    %c0_17 = arith.constant 0 : index
    %19 = vector.load %arg6[%c0_15, %c0_16, %c0_17] : memref<1x2x2xf32, #tpu.memory_space<vmem>>, vector<1x2x2xf32>
    %20 = vector.shape_cast %19 : vector<1x2x2xf32> to vector<2x2xf32>
    %21 = vector.shape_cast %18 : vector<2x2xf32> to vector<1x2x2xf32>
    tpu.vector_store %arg6[%c0_15, %c0_16, %c0_17], %21 {strides = array<i32>} : memref<1x2x2xf32, #tpu.memory_space<vmem>>, vector<1x2x2xf32>,
    return
  }
  func.func @transform_0(%arg0: i32) -> (i32, i32) {
    %c0_i32 = arith.constant 0 : i32
    %c0_i32_0 = arith.constant 0 : i32
    %c0_i32_1 = arith.constant 0 : i32
    return %c0_i32, %c0_i32_0 : i32, i32
  }
  func.func @transform_1(%arg0: i32) -> (i32, i32, i32) {
    %c0_i32 = arith.constant 0 : i32
    %c0_i32_0 = arith.constant 0 : i32
    %c0_i32_1 = arith.constant 0 : i32
    return %arg0, %c0_i32, %c0_i32_0 : i32, i32, i32
  }
  func.func @transform_2(%arg0: i32) -> (i32, i32, i32) {
    %c0_i32 = arith.constant 0 : i32
    %c0_i32_0 = arith.constant 0 : i32
    %c0_i32_1 = arith.constant 0 : i32
    return %arg0, %c0_i32, %c0_i32_0 : i32, i32, i32
  }
  func.func @transform_3(%arg0: i32) -> (i32, i32, i32) {
    %c0_i32 = arith.constant 0 : i32
    %c0_i32_0 = arith.constant 0 : i32
    %c0_i32_1 = arith.constant 0 : i32
    return %arg0, %c0_i32, %c0_i32_0 : i32, i32, i32
  }
  func.func @transform_4(%arg0: i32) -> (i32, i32, i32) {
    %c0_i32 = arith.constant 0 : i32
    %c0_i32_0 = arith.constant 0 : i32
    %c0_i32_1 = arith.constant 0 : i32
    return %arg0, %c0_i32, %c0_i32_0 : i32, i32, i32
  }
  func.func @transform_5(%arg0: i32) -> (i32, i32, i32) {
    %c0_i32 = arith.constant 0 : i32
    %c0_i32_0 = arith.constant 0 : i32
    %c0_i32_1 = arith.constant 0 : i32
    return %arg0, %c0_i32, %c0_i32_0 : i32, i32, i32
  }
}

</mosaic_0001>

<llo_original>
// kernel: ssl_conv_pred_forward.3
$region0: #{ssl_conv_pred_forward.3}
  #allocation0 [shape = 'u32[]', space=smem, size = 0x4, offset = 0x4, fixed_abs, tag = 'smem constant byte address 0x4 - core index']
  #allocation1 [shape = 'u32[144,128]{1,0:T(1,128)}', space=vmem, size = 0x12000, scoped, tag = 'internal scratch']
  %s0 = inlined_call_operand.vmem [shape: f32[2,16], index: 0, kind: input, shape index: {}]
  %s1 = inlined_call_operand.vmem [shape: bf16[3,16,32], index: 1, kind: input, shape index: {}]
  %s2 = inlined_call_operand.vmem [shape: f32[3,1,32], index: 2, kind: input, shape index: {}]
  %s3 = inlined_call_operand.vmem [shape: bf16[3,32,2], index: 3, kind: input, shape index: {}]
  %s4 = inlined_call_operand.vmem [shape: f32[3,1,2], index: 4, kind: input, shape index: {}]
  %s5 = inlined_call_operand.vmem [shape: f32[3,2,2], index: 5, kind: output, shape index: {}]
  %s6 = sld [smem:[#allocation0]]
  $region53: #{ssl_conv_pred_forward.3} parent=0
    _
  %s8 = ssub.s32 1, %s6
  %s9 = scalar_select 0, %s8, %s6
  loop: start=0, step=1, limit=5
  $region2: #{ssl_conv_pred_forward.3} parent=0 // loop_pre_header
    _
  $region3: #{ssl_conv_pred_forward.3} parent=0 // loop_header
    %s11 = sphi 0, %s15
    %p12 = scmp.ge.s32.totalorder %s11, 5
    %s19 = sphi 0, %s19
    %s21 = sphi 0, %s19
    %s22 = sphi 0, %s21
    %s36 = sphi 0, %s22
    %s42 = sphi 0, %s44
    %s45 = sphi 0, %s42
    %s46 = sphi 0, %s45
    %s62 = sphi 0, %s46
    %s68 = sphi 0, %s70
    %s71 = sphi 0, %s68
    %s72 = sphi 0, %s71
    %s88 = sphi 0, %s72
    %s94 = sphi 0, %s96
    %s97 = sphi 0, %s94
    %s98 = sphi 0, %s97
    %s114 = sphi 0, %s98
    %s120 = sphi 0, %s122
    %s123 = sphi 0, %s120
    %s124 = sphi 0, %s123
    %s140 = sphi 0, %s124
    %s146 = sphi 0, %s148
    %s149 = sphi 0, %s146
    %s150 = sphi 0, %s149
    %s166 = sphi 0, %s150
  $region4: #{ssl_conv_pred_forward.3} parent=0 // loop_header_branch
    %14 = sbr.rel (%p12) target = $region8
  $region5: #{ssl_conv_pred_forward.3} parent=0 // loop_body
    %s16 = ssub.s32 %s11, 1
    %s17 = ssub.s32 %s11, 2
    %s18 = sadd.s32 %s11, 1
    %s20 = sadd.s32 %s19, 1
    %p23 = scmp.eq.s32.totalorder %s11, 2
    %p24 = scmp.ne.s32.totalorder %s19, %s21
    %p25 = scmp.eq.s32.totalorder %s11, 0
    %p26 = por %p24, %p25
    %p27 = scmp.ne.s32.totalorder %s19, %s21
    %p28 = scmp.eq.s32.totalorder %s16, 2
    %p29 = por %p27, %p28
    %p30 = scmp.ne.s32.totalorder %s21, %s22
    %p31 = scmp.eq.s32.totalorder %s16, 0
    %p32 = por %p30, %p31
    %p33 = scmp.ne.s32.totalorder %s21, %s22
    %p34 = scmp.eq.s32.totalorder %s17, 2
    %p35 = por %p33, %p34
    %p37 = scmp.ne.s32.totalorder %s22, %s36
    %p38 = scmp.eq.s32.totalorder %s17, 0
    %p39 = por %p37, %p38
    %s40 = ssub.s32 %s11, %s18
    %p41 = scmp.eq.s32.totalorder %s40, 0
    %s43 = sadd.s32 %s42, 1
    %s44 = scalar_select %p41, %s42, %s43
    %p47 = pneg %p41
    %p48 = scmp.eq.s32.totalorder %s11, 2
    %p49 = por %p47, %p48
    %p50 = scmp.ne.s32.totalorder %s42, %s45
    %p51 = scmp.eq.s32.totalorder %s11, 0
    %p52 = por %p50, %p51
    %p53 = scmp.ne.s32.totalorder %s42, %s45
    %p54 = scmp.eq.s32.totalorder %s16, 2
    %p55 = por %p53, %p54
    %p56 = scmp.ne.s32.totalorder %s45, %s46
    %p57 = scmp.eq.s32.totalorder %s16, 0
    %p58 = por %p56, %p57
    %p59 = scmp.ne.s32.totalorder %s45, %s46
    %p60 = scmp.eq.s32.totalorder %s17, 2
    %p61 = por %p59, %p60
    %p63 = scmp.ne.s32.totalorder %s46, %s62
    %p64 = scmp.eq.s32.totalorder %s17, 0
    %p65 = por %p63, %p64
    %s66 = ssub.s32 %s11, %s18
    %p67 = scmp.eq.s32.totalorder %s66, 0
    %s69 = sadd.s32 %s68, 1
    %s70 = scalar_select %p67, %s68, %s69
    %p73 = pneg %p67
    %p74 = scmp.eq.s32.totalorder %s11, 2
    %p75 = por %p73, %p74
    %p76 = scmp.ne.s32.totalorder %s68, %s71
    %p77 = scmp.eq.s32.totalorder %s11, 0
    %p78 = por %p76, %p77
    %p79 = scmp.ne.s32.totalorder %s68, %s71
    %p80 = scmp.eq.s32.totalorder %s16, 2
    %p81 = por %p79, %p80
    %p82 = scmp.ne.s32.totalorder %s71, %s72
    %p83 = scmp.eq.s32.totalorder %s16, 0
    %p84 = por %p82, %p83
    %p85 = scmp.ne.s32.totalorder %s71, %s72
    %p86 = scmp.eq.s32.totalorder %s17, 2
    %p87 = por %p85, %p86
    %p89 = scmp.ne.s32.totalorder %s72, %s88
    %p90 = scmp.eq.s32.totalorder %s17, 0
    %p91 = por %p89, %p90
    %s92 = ssub.s32 %s11, %s18
    %p93 = scmp.eq.s32.totalorder %s92, 0
    %s95 = sadd.s32 %s94, 1
    %s96 = scalar_select %p93, %s94, %s95
    %p99 = pneg %p93
    %p100 = scmp.eq.s32.totalorder %s11, 2
    %p101 = por %p99, %p100
    %p102 = scmp.ne.s32.totalorder %s94, %s97
    %p103 = scmp.eq.s32.totalorder %s11, 0
    %p104 = por %p102, %p103
    %p105 = scmp.ne.s32.totalorder %s94, %s97
    %p106 = scmp.eq.s32.totalorder %s16, 2
    %p107 = por %p105, %p106
    %p108 = scmp.ne.s32.totalorder %s97, %s98
    %p109 = scmp.eq.s32.totalorder %s16, 0
    %p110 = por %p108, %p109
    %p111 = scmp.ne.s32.totalorder %s97, %s98
    %p112 = scmp.eq.s32.totalorder %s17, 2
    %p113 = por %p111, %p112
    %p115 = scmp.ne.s32.totalorder %s98, %s114
    %p116 = scmp.eq.s32.totalorder %s17, 0
    %p117 = por %p115, %p116
    %s118 = ssub.s32 %s11, %s18
    %p119 = scmp.eq.s32.totalorder %s118, 0
    %s121 = sadd.s32 %s120, 1
    %s122 = scalar_select %p119, %s120, %s121
    %p125 = pneg %p119
    %p126 = scmp.eq.s32.totalorder %s11, 2
    %p127 = por %p125, %p126
    %p128 = scmp.ne.s32.totalorder %s120, %s123
    %p129 = scmp.eq.s32.totalorder %s11, 0
    %p130 = por %p128, %p129
    %p131 = scmp.ne.s32.totalorder %s120, %s123
    %p132 = scmp.eq.s32.totalorder %s16, 2
    %p133 = por %p131, %p132
    %p134 = scmp.ne.s32.totalorder %s123, %s124
    %p135 = scmp.eq.s32.totalorder %s16, 0
    %p136 = por %p134, %p135
    %p137 = scmp.ne.s32.totalorder %s123, %s124
    %p138 = scmp.eq.s32.totalorder %s17, 2
    %p139 = por %p137, %p138
    %p141 = scmp.ne.s32.totalorder %s124, %s140
    %p142 = scmp.eq.s32.totalorder %s17, 0
    %p143 = por %p141, %p142
    %s144 = ssub.s32 %s11, %s18
    %p145 = scmp.eq.s32.totalorder %s144, 0
    %s147 = sadd.s32 %s146, 1
    %s148 = scalar_select %p145, %s146, %s147
    %p151 = pneg %p145
    %p152 = scmp.eq.s32.totalorder %s11, 2
    %p153 = por %p151, %p152
    %p154 = scmp.ne.s32.totalorder %s146, %s149
    %p155 = scmp.eq.s32.totalorder %s11, 0
    %p156 = por %p154, %p155
    %p157 = scmp.ne.s32.totalorder %s146, %s149
    %p158 = scmp.eq.s32.totalorder %s16, 2
    %p159 = por %p157, %p158
    %p160 = scmp.ne.s32.totalorder %s149, %s150
    %p161 = scmp.eq.s32.totalorder %s16, 0
    %p162 = por %p160, %p161
    %p163 = scmp.ne.s32.totalorder %s149, %s150
    %p164 = scmp.eq.s32.totalorder %s17, 2
    %p165 = por %p163, %p164
    %p167 = scmp.ne.s32.totalorder %s150, %s166
    %p168 = scmp.eq.s32.totalorder %s17, 0
    %p169 = por %p167, %p168
    %p170 = scmp.le.s32.totalorder 1, %s11
    %p171 = scmp.lt.s32.totalorder %s11, 4
    %p172 = pnand %p170, %p171
    %p173 = pneg %p172
    // Predicated region
    $region9: #{ssl_conv_pred_forward.3} parent=5 // pred_check
      _
    $region10: #{ssl_conv_pred_forward.3} parent=5 // pred_check_branch
      %175 = sbr.rel (%p172) target = $region12
    $region11: #{ssl_conv_pred_forward.3} parent=5 // pred_region
      %s176 = ssub.s32 %s11, 1
      // Predicated region
      $region13: #{ssl_conv_pred_forward.3} parent=11 // pred_check
        %p177 = pneg %p32
      $region14: #{ssl_conv_pred_forward.3} parent=11 // pred_check_branch
        %179 = sbr.rel (%p177) target = $region16
      $region15: #{ssl_conv_pred_forward.3} parent=11 // pred_region
        _
      $region16: #{ssl_conv_pred_forward.3} parent=11 // pred_fallthru
        _
    $region12: #{ssl_conv_pred_forward.3} parent=5 // pred_fallthru
      _
    %p180 = scmp.lt.s32.totalorder %s11, 3
    // Predicated region
    $region17: #{ssl_conv_pred_forward.3} parent=5 // pred_check
      %p181 = pneg %p180
    $region18: #{ssl_conv_pred_forward.3} parent=5 // pred_check_branch
      %183 = sbr.rel (%p181) target = $region20
    $region19: #{ssl_conv_pred_forward.3} parent=5 // pred_region
      // Predicated region
      $region21: #{ssl_conv_pred_forward.3} parent=19 // pred_check
        %p184 = pneg %p52
      $region22: #{ssl_conv_pred_forward.3} parent=19 // pred_check_branch
        %186 = sbr.rel (%p184) target = $region24
      $region23: #{ssl_conv_pred_forward.3} parent=19 // pred_region
        %p187 = scmp.lt.s32.totalorder %s11, 2
        %s188 = scalar_select %p187, %s11, 2
        %s189 = smul.addr %s188, 2
        %s190 = smul.addr %s189, 4
        %s191 = scalar_lea.vmem %s1, %s190
      $region24: #{ssl_conv_pred_forward.3} parent=19 // pred_fallthru
        _
      // Predicated region
      $region25: #{ssl_conv_pred_forward.3} parent=19 // pred_check
        %p192 = pneg %p78
      $region26: #{ssl_conv_pred_forward.3} parent=19 // pred_check_branch
        %194 = sbr.rel (%p192) target = $region28
      $region27: #{ssl_conv_pred_forward.3} parent=19 // pred_region
        %p195 = scmp.lt.s32.totalorder %s11, 2
        %s196 = scalar_select %p195, %s11, 2
        %s197 = scalar_lea.vmem %s2, %s196
      $region28: #{ssl_conv_pred_forward.3} parent=19 // pred_fallthru
        _
      // Predicated region
      $region29: #{ssl_conv_pred_forward.3} parent=19 // pred_check
        %p198 = pneg %p104
      $region30: #{ssl_conv_pred_forward.3} parent=19 // pred_check_branch
        %200 = sbr.rel (%p198) target = $region32
      $region31: #{ssl_conv_pred_forward.3} parent=19 // pred_region
        %p201 = scmp.lt.s32.totalorder %s11, 2
        %s202 = scalar_select %p201, %s11, 2
        %s203 = smul.addr %s202, 4
        %s204 = smul.addr %s203, 4
        %s205 = scalar_lea.vmem %s3, %s204
      $region32: #{ssl_conv_pred_forward.3} parent=19 // pred_fallthru
        _
      // Predicated region
      $region33: #{ssl_conv_pred_forward.3} parent=19 // pred_check
        %p206 = pneg %p130
      $region34: #{ssl_conv_pred_forward.3} parent=19 // pred_check_branch
        %208 = sbr.rel (%p206) target = $region36
      $region35: #{ssl_conv_pred_forward.3} parent=19 // pred_region
        %p209 = scmp.lt.s32.totalorder %s11, 2
        %s210 = scalar_select %p209, %s11, 2
        %s211 = scalar_lea.vmem %s4, %s210
      $region36: #{ssl_conv_pred_forward.3} parent=19 // pred_fallthru
        _
    $region20: #{ssl_conv_pred_forward.3} parent=5 // pred_fallthru
      _
    %p212 = scmp.le.s32.totalorder 1, %s11
    %p213 = scmp.lt.s32.totalorder %s11, 4
    %p214 = pnand %p212, %p213
    %p215 = pneg %p214
    // Predicated region
    $region37: #{ssl_conv_pred_forward.3} parent=5 // pred_check
      _
    $region38: #{ssl_conv_pred_forward.3} parent=5 // pred_check_branch
      %217 = sbr.rel (%p214) target = $region40
    $region39: #{ssl_conv_pred_forward.3} parent=5 // pred_region
      %s218 = ssub.s32 %s11, 1
      %p219 = pneg %p32
      %p220 = pneg %p29
      %p221 = scmp.lt.s32.totalorder %s16, 2
      %s222 = scalar_select %p221, %s16, 2
      %s223 = smul.addr %s222, 2
      %s224 = smul.addr %s223, 4
      %s225 = scalar_lea.vmem %s1, %s224
      %p226 = pneg %p58
      %p227 = pneg %p55
      %p228 = scmp.lt.s32.totalorder %s16, 2
      %s229 = scalar_select %p228, %s16, 2
      %s230 = scalar_lea.vmem %s2, %s229
      %p231 = pneg %p84
      %p232 = pneg %p81
      %p233 = scmp.lt.s32.totalorder %s16, 2
      %s234 = scalar_select %p233, %s16, 2
      %s235 = smul.addr %s234, 4
      %s236 = smul.addr %s235, 4
      %s237 = scalar_lea.vmem %s3, %s236
      %p238 = pneg %p110
      %p239 = pneg %p107
      %p240 = scmp.lt.s32.totalorder %s16, 2
      %s241 = scalar_select %p240, %s16, 2
      %s242 = scalar_lea.vmem %s4, %s241
      %p243 = pneg %p136
      %p244 = pneg %p133
      %p245 = pneg %p162
      %p246 = pneg %p159
      %p247 = scmp.lt.s32.totalorder %s16, 2
      %s248 = scalar_select %p247, %s16, 2
      %s249 = smul.addr %s248, 2
      %s250 = scalar_lea.vmem %s5, %s249
      %p251 = scmp.lt.s32.totalorder %s16, 2
      %s252 = scalar_select %p251, %s16, 2
      %s253 = smul.addr %s252, 2
      %s254 = smul.addr %s253, 4
      %s255 = scalar_lea.vmem %s1, %s254
      %p256 = scmp.lt.s32.totalorder %s16, 2
      %s257 = scalar_select %p256, %s16, 2
      %s258 = scalar_lea.vmem %s2, %s257
      %p259 = scmp.lt.s32.totalorder %s16, 2
      %s260 = scalar_select %p259, %s16, 2
      %s261 = smul.addr %s260, 4
      %s262 = smul.addr %s261, 4
      %s263 = scalar_lea.vmem %s3, %s262
      %p264 = scmp.lt.s32.totalorder %s16, 2
      %s265 = scalar_select %p264, %s16, 2
      %s266 = scalar_lea.vmem %s4, %s265
      %p267 = scmp.lt.s32.totalorder %s16, 2
      %s268 = scalar_select %p267, %s16, 2
      %s269 = smul.addr %s268, 2
      %s270 = scalar_lea.vmem %s5, %s269
      %v272 = vld [vmem:[%s0] sm:$0x3]
      %v273 = vpack.c.bf16 %v272, %v272
      %v274 = vld [vmem:[%s255] sm:$0xf]
      %v275 = vld [vmem:[%s255 + $0x4] sm:$0xf]
      %v276 = vld [vmem:[%s258] sm:$0x1]
      %v278 = vlaneseq
      %v279 = vshrl.u32 %v278, 7
      %v280 = vsub.s32 0, %v279
      %v281 = vrot.slane %v276, %v280
      %v285 = vunpack.c.l.b16 %v274
      %v286 = vunpack.c.l.b16 %v275
      %v287 = vpack.c.b16 %v286, %v285
      %vm289 = vcmask 130048
      %v291 = vsel %vm289, %v273, 0
      %293 = vmatprep.subr.bf16.mxu0 0
      %294 = vmatpush1.bf16.msra.mxu0 %v287
      %295 = vmatprep.subr.bf16.mxu0 0
      %296 = vmatpush1.bf16.msra.mxu0 0
      %297 = vmatprep.subr.bf16.mxu0 0
      %298 = vmatpush1.bf16.msra.mxu0 0
      %299 = vmatprep.subr.bf16.mxu0 0
      %300 = vmatpush1.bf16.msra.mxu0 0
      %301 = vmatprep.subr.bf16.mxu0 0
      %302 = vmatpush1.bf16.msra.mxu0 0
      %303 = vmatprep.subr.bf16.mxu0 0
      %304 = vmatpush1.bf16.msra.mxu0 0
      %305 = vmatprep.subr.bf16.mxu0 0
      %306 = vmatpush1.bf16.msra.mxu0 0
      %307 = vmatprep.subr.bf16.mxu0 0
      %308 = vmatpush1.bf16.msra.mxu0 0
      %309 = vmatprep.subr.bf16.mxu0 0
      %310 = vmatpush1.bf16.msra.mxu0 0
      %311 = vmatprep.subr.bf16.mxu0 0
      %312 = vmatpush1.bf16.msra.mxu0 0
      %313 = vmatprep.subr.bf16.mxu0 0
      %314 = vmatpush1.bf16.msra.mxu0 0
      %315 = vmatprep.subr.bf16.mxu0 0
      %316 = vmatpush1.bf16.msra.mxu0 0
      %317 = vmatprep.subr.bf16.mxu0 0
      %318 = vmatpush1.bf16.msra.mxu0 0
      %319 = vmatprep.subr.bf16.mxu0 0
      %320 = vmatpush1.bf16.msra.mxu0 0
      %321 = vmatprep.subr.bf16.mxu0 0
      %322 = vmatpush1.bf16.msra.mxu0 0
      %323 = vmatprep.subr.bf16.mxu0 0
      %324 = vmatpush1.bf16.msra.mxu0 0
      %325 = vmatprep.mubr.bf16.mxu0 0
      %326 = vmatmul.mubr.bf16.gmra.mrb[0].mxu0 %v291
      %v327 = vpop.f32.mrb[0].mxu0
      %v328 = vadd.f32 %v281, %v327
      %v329 = vpop.f32.mrb[0].mxu0
      %v330 = vpop.f32.mrb[0].mxu0
      %v331 = vpop.f32.mrb[0].mxu0
      %332 = vdwg.mxu0
      %v333 = vmax.f32 %v328, 0.0
      %v334 = vpack.c.bf16 %v333, %v333
      %v335 = vld [vmem:[%s263] sm:$0xf]
      %v336 = vld [vmem:[%s263 + $0x4] sm:$0xf]
      %v337 = vld [vmem:[%s263 + $0x8] sm:$0xf]
      %v338 = vld [vmem:[%s263 + $0xc] sm:$0xf]
      %v339 = vld [vmem:[%s266] sm:$0x1]
      %v341 = vlaneseq
      %v342 = vshrl.u32 %v341, 7
      %v343 = vsub.s32 0, %v342
      %v344 = vrot.slane %v339, %v343
      %v350 = vunpack.c.l.b16 %v335
      %v351 = vunpack.c.l.b16 %v336
      %v352 = vunpack.c.l.b16 %v337
      %v353 = vunpack.c.l.b16 %v338
      %v354 = vpack.c.b16 %v351, %v350
      %v355 = vpack.c.b16 %v353, %v352
      %vm358 = vcmask 261120
      %v360 = vsel %vm358, %v334, 0
      %362 = vmatprep.subr.bf16.mxu0 0
      %363 = vmatpush1.bf16.msra.mxu0 %v354
      %364 = vmatprep.subr.bf16.mxu0 0
      %365 = vmatpush1.bf16.msra.mxu0 %v355
      %366 = vmatprep.subr.bf16.mxu0 0
      %367 = vmatpush1.bf16.msra.mxu0 0
      %368 = vmatprep.subr.bf16.mxu0 0
      %369 = vmatpush1.bf16.msra.mxu0 0
      %370 = vmatprep.subr.bf16.mxu0 0
      %371 = vmatpush1.bf16.msra.mxu0 0
      %372 = vmatprep.subr.bf16.mxu0 0
      %373 = vmatpush1.bf16.msra.mxu0 0
      %374 = vmatprep.subr.bf16.mxu0 0
      %375 = vmatpush1.bf16.msra.mxu0 0
      %376 = vmatprep.subr.bf16.mxu0 0
      %377 = vmatpush1.bf16.msra.mxu0 0
      %378 = vmatprep.subr.bf16.mxu0 0
      %379 = vmatpush1.bf16.msra.mxu0 0
      %380 = vmatprep.subr.bf16.mxu0 0
      %381 = vmatpush1.bf16.msra.mxu0 0
      %382 = vmatprep.subr.bf16.mxu0 0
      %383 = vmatpush1.bf16.msra.mxu0 0
      %384 = vmatprep.subr.bf16.mxu0 0
      %385 = vmatpush1.bf16.msra.mxu0 0
      %386 = vmatprep.subr.bf16.mxu0 0
      %387 = vmatpush1.bf16.msra.mxu0 0
      %388 = vmatprep.subr.bf16.mxu0 0
      %389 = vmatpush1.bf16.msra.mxu0 0
      %390 = vmatprep.subr.bf16.mxu0 0
      %391 = vmatpush1.bf16.msra.mxu0 0
      %392 = vmatprep.subr.bf16.mxu0 0
      %393 = vmatpush1.bf16.msra.mxu0 0
      %394 = vmatprep.mubr.bf16.mxu0 0
      %395 = vmatmul.mubr.bf16.gmra.mrb[0].mxu0 %v360
      %v396 = vpop.f32.mrb[0].mxu0
      %v397 = vadd.f32 %v344, %v396
      %v398 = vpop.f32.mrb[0].mxu0
      %v399 = vpop.f32.mrb[0].mxu0
      %v400 = vpop.f32.mrb[0].mxu0
      %401 = vdwg.mxu0
      %vm402 = vcmask 9216
      %403 = vst.msk [vmem:[%s270] sm:$0x3] %vm402, %v397
      %p404 = scmp.lt.s32.totalorder %s16, 2
      %s405 = scalar_select %p404, %s16, 2
      %s406 = smul.addr %s405, 2
      %s407 = scalar_lea.vmem %s5, %s406
      // Predicated region
      $region41: #{ssl_conv_pred_forward.3} parent=39 // pred_check
        %p408 = pneg %p159
      $region42: #{ssl_conv_pred_forward.3} parent=39 // pred_check_branch
        %410 = sbr.rel (%p408) target = $region44
      $region43: #{ssl_conv_pred_forward.3} parent=39 // pred_region
        _
      $region44: #{ssl_conv_pred_forward.3} parent=39 // pred_fallthru
        _
    $region40: #{ssl_conv_pred_forward.3} parent=5 // pred_fallthru
      _
    %p411 = scmp.le.s32.totalorder 2, %s11
    // Predicated region
    $region45: #{ssl_conv_pred_forward.3} parent=5 // pred_check
      %p412 = pneg %p411
    $region46: #{ssl_conv_pred_forward.3} parent=5 // pred_check_branch
      %414 = sbr.rel (%p412) target = $region48
    $region47: #{ssl_conv_pred_forward.3} parent=5 // pred_region
      %s415 = ssub.s32 %s11, 2
      // Predicated region
      $region49: #{ssl_conv_pred_forward.3} parent=47 // pred_check
        %p416 = pneg %p165
      $region50: #{ssl_conv_pred_forward.3} parent=47 // pred_check_branch
        %418 = sbr.rel (%p416) target = $region52
      $region51: #{ssl_conv_pred_forward.3} parent=47 // pred_region
        %p419 = scmp.lt.s32.totalorder %s17, 2
        %s420 = scalar_select %p419, %s17, 2
        %s421 = smul.addr %s420, 2
        %s422 = scalar_lea.vmem %s5, %s421
      $region52: #{ssl_conv_pred_forward.3} parent=47 // pred_fallthru
        _
    $region48: #{ssl_conv_pred_forward.3} parent=5 // pred_fallthru
      _
  $region6: #{ssl_conv_pred_forward.3} parent=0 // loop_footer
    %s15 = sadd.s32 1, %s11
  $region7: #{ssl_conv_pred_forward.3} parent=0 // loop_footer_branch
    %10 = sbr.rel target = $region3
  $region8: #{ssl_conv_pred_forward.3} parent=0 // loop_exit
    _

// kernel: ssl_conv_pred_forward.2
$region0: #{ssl_conv_pred_forward.2}
  #allocation0 [shape = 'u32[]', space=smem, size = 0x4, offset = 0x4, fixed_abs, tag = 'smem constant byte address 0x4 - core index']
  #allocation1 [shape = 'u32[144,128]{1,0:T(1,128)}', space=vmem, size = 0x12000, scoped, tag = 'internal scratch']
  %s0 = inlined_call_operand.vmem [shape: bf16[2,1,64], index: 0, kind: input, shape index: {}]
  %s1 = inlined_call_operand.vmem [shape: bf16[8,5], index: 1, kind: input, shape index: {}]
  %s2 = inlined_call_operand.vmem [shape: f32[8,1], index: 2, kind: input, shape index: {}]
  %s3 = inlined_call_operand.vmem [shape: bf16[8,40], index: 3, kind: input, shape index: {}]
  %s4 = inlined_call_operand.vmem [shape: f32[8,1], index: 4, kind: input, shape index: {}]
  %s5 = inlined_call_operand.vmem [shape: bf16[53,27], index: 5, kind: input, shape index: {}]
  %s6 = inlined_call_operand.vmem [shape: bf16[16,24], index: 6, kind: input, shape index: {}]
  %s7 = inlined_call_operand.vmem [shape: f32[16,1], index: 7, kind: input, shape index: {}]
  %s8 = inlined_call_operand.vmem [shape: bf16[16,48], index: 8, kind: input, shape index: {}]
  %s9 = inlined_call_operand.vmem [shape: f32[16,1], index: 9, kind: input, shape index: {}]
  %s10 = inlined_call_operand.vmem [shape: bf16[20,10], index: 10, kind: input, shape index: {}]
  %s11 = inlined_call_operand.vmem [shape: f32[2,16,1], index: 11, kind: output, shape index: {}]
  %s12 = sld [smem:[#allocation0]]
  $region77: #{ssl_conv_pred_forward.2} parent=0
    _
  %s14 = ssub.s32 1, %s12
  %s15 = scalar_select 0, %s14, %s12
  loop: start=0, step=1, limit=4
  $region2: #{ssl_conv_pred_forward.2} parent=0 // loop_pre_header
    _
  $region3: #{ssl_conv_pred_forward.2} parent=0 // loop_header
    %s17 = sphi 0, %s21
    %p18 = scmp.ge.s32.totalorder %s17, 4
    %s27 = sphi 0, %s29
    %s30 = sphi 0, %s27
    %s31 = sphi 0, %s30
    %s47 = sphi 0, %s31
    %s51 = sphi 0, %s51
    %s53 = sphi 0, %s51
    %s54 = sphi 0, %s53
    %s68 = sphi 0, %s54
    %s72 = sphi 0, %s72
    %s74 = sphi 0, %s72
    %s75 = sphi 0, %s74
    %s89 = sphi 0, %s75
    %s93 = sphi 0, %s93
    %s95 = sphi 0, %s93
    %s96 = sphi 0, %s95
    %s110 = sphi 0, %s96
    %s114 = sphi 0, %s114
    %s116 = sphi 0, %s114
    %s117 = sphi 0, %s116
    %s131 = sphi 0, %s117
    %s135 = sphi 0, %s135
    %s137 = sphi 0, %s135
    %s138 = sphi 0, %s137
    %s152 = sphi 0, %s138
    %s156 = sphi 0, %s156
    %s158 = sphi 0, %s156
    %s159 = sphi 0, %s158
    %s173 = sphi 0, %s159
    %s177 = sphi 0, %s177
    %s179 = sphi 0, %s177
    %s180 = sphi 0, %s179
    %s194 = sphi 0, %s180
    %s198 = sphi 0, %s198
    %s200 = sphi 0, %s198
    %s201 = sphi 0, %s200
    %s215 = sphi 0, %s201
    %s219 = sphi 0, %s219
    %s221 = sphi 0, %s219
    %s222 = sphi 0, %s221
    %s236 = sphi 0, %s222
    %s240 = sphi 0, %s240
    %s242 = sphi 0, %s240
    %s243 = sphi 0, %s242
    %s257 = sphi 0, %s243
    %s263 = sphi 0, %s265
    %s266 = sphi 0, %s263
    %s267 = sphi 0, %s266
    %s283 = sphi 0, %s267
  $region4: #{ssl_conv_pred_forward.2} parent=0 // loop_header_branch
    %20 = sbr.rel (%p18) target = $region8
  $region5: #{ssl_conv_pred_forward.2} parent=0 // loop_body
    %s22 = ssub.s32 %s17, 1
    %s23 = ssub.s32 %s17, 2
    %s24 = sadd.s32 %s17, 1
    %s25 = ssub.s32 %s17, %s24
    %p26 = scmp.eq.s32.totalorder %s25, 0
    %s28 = sadd.s32 %s27, 1
    %s29 = scalar_select %p26, %s27, %s28
    %p32 = pneg %p26
    %p33 = scmp.eq.s32.totalorder %s17, 1
    %p34 = por %p32, %p33
    %p35 = scmp.ne.s32.totalorder %s27, %s30
    %p36 = scmp.eq.s32.totalorder %s17, 0
    %p37 = por %p35, %p36
    %p38 = scmp.ne.s32.totalorder %s27, %s30
    %p39 = scmp.eq.s32.totalorder %s22, 1
    %p40 = por %p38, %p39
    %p41 = scmp.ne.s32.totalorder %s30, %s31
    %p42 = scmp.eq.s32.totalorder %s22, 0
    %p43 = por %p41, %p42
    %p44 = scmp.ne.s32.totalorder %s30, %s31
    %p45 = scmp.eq.s32.totalorder %s23, 1
    %p46 = por %p44, %p45
    %p48 = scmp.ne.s32.totalorder %s31, %s47
    %p49 = scmp.eq.s32.totalorder %s23, 0
    %p50 = por %p48, %p49
    %s52 = sadd.s32 %s51, 1
    %p55 = scmp.eq.s32.totalorder %s17, 1
    %p56 = scmp.ne.s32.totalorder %s51, %s53
    %p57 = scmp.eq.s32.totalorder %s17, 0
    %p58 = por %p56, %p57
    %p59 = scmp.ne.s32.totalorder %s51, %s53
    %p60 = scmp.eq.s32.totalorder %s22, 1
    %p61 = por %p59, %p60
    %p62 = scmp.ne.s32.totalorder %s53, %s54
    %p63 = scmp.eq.s32.totalorder %s22, 0
    %p64 = por %p62, %p63
    %p65 = scmp.ne.s32.totalorder %s53, %s54
    %p66 = scmp.eq.s32.totalorder %s23, 1
    %p67 = por %p65, %p66
    %p69 = scmp.ne.s32.totalorder %s54, %s68
    %p70 = scmp.eq.s32.totalorder %s23, 0
    %p71 = por %p69, %p70
    %s73 = sadd.s32 %s72, 1
    %p76 = scmp.eq.s32.totalorder %s17, 1
    %p77 = scmp.ne.s32.totalorder %s72, %s74
    %p78 = scmp.eq.s32.totalorder %s17, 0
    %p79 = por %p77, %p78
    %p80 = scmp.ne.s32.totalorder %s72, %s74
    %p81 = scmp.eq.s32.totalorder %s22, 1
    %p82 = por %p80, %p81
    %p83 = scmp.ne.s32.totalorder %s74, %s75
    %p84 = scmp.eq.s32.totalorder %s22, 0
    %p85 = por %p83, %p84
    %p86 = scmp.ne.s32.totalorder %s74, %s75
    %p87 = scmp.eq.s32.totalorder %s23, 1
    %p88 = por %p86, %p87
    %p90 = scmp.ne.s32.totalorder %s75, %s89
    %p91 = scmp.eq.s32.totalorder %s23, 0
    %p92 = por %p90, %p91
    %s94 = sadd.s32 %s93, 1
    %p97 = scmp.eq.s32.totalorder %s17, 1
    %p98 = scmp.ne.s32.totalorder %s93, %s95
    %p99 = scmp.eq.s32.totalorder %s17, 0
    %p100 = por %p98, %p99
    %p101 = scmp.ne.s32.totalorder %s93, %s95
    %p102 = scmp.eq.s32.totalorder %s22, 1
    %p103 = por %p101, %p102
    %p104 = scmp.ne.s32.totalorder %s95, %s96
    %p105 = scmp.eq.s32.totalorder %s22, 0
    %p106 = por %p104, %p105
    %p107 = scmp.ne.s32.totalorder %s95, %s96
    %p108 = scmp.eq.s32.totalorder %s23, 1
    %p109 = por %p107, %p108
    %p111 = scmp.ne.s32.totalorder %s96, %s110
    %p112 = scmp.eq.s32.totalorder %s23, 0
    %p113 = por %p111, %p112
    %s115 = sadd.s32 %s114, 1
    %p118 = scmp.eq.s32.totalorder %s17, 1
    %p119 = scmp.ne.s32.totalorder %s114, %s116
    %p120 = scmp.eq.s32.totalorder %s17, 0
    %p121 = por %p119, %p120
    %p122 = scmp.ne.s32.totalorder %s114, %s116
    %p123 = scmp.eq.s32.totalorder %s22, 1
    %p124 = por %p122, %p123
    %p125 = scmp.ne.s32.totalorder %s116, %s117
    %p126 = scmp.eq.s32.totalorder %s22, 0
    %p127 = por %p125, %p126
    %p128 = scmp.ne.s32.totalorder %s116, %s117
    %p129 = scmp.eq.s32.totalorder %s23, 1
    %p130 = por %p128, %p129
    %p132 = scmp.ne.s32.totalorder %s117, %s131
    %p133 = scmp.eq.s32.totalorder %s23, 0
    %p134 = por %p132, %p133
    %s136 = sadd.s32 %s135, 1
    %p139 = scmp.eq.s32.totalorder %s17, 1
    %p140 = scmp.ne.s32.totalorder %s135, %s137
    %p141 = scmp.eq.s32.totalorder %s17, 0
    %p142 = por %p140, %p141
    %p143 = scmp.ne.s32.totalorder %s135, %s137
    %p144 = scmp.eq.s32.totalorder %s22, 1
    %p145 = por %p143, %p144
    %p146 = scmp.ne.s32.totalorder %s137, %s138
    %p147 = scmp.eq.s32.totalorder %s22, 0
    %p148 = por %p146, %p147
    %p149 = scmp.ne.s32.totalorder %s137, %s138
    %p150 = scmp.eq.s32.totalorder %s23, 1
    %p151 = por %p149, %p150
    %p153 = scmp.ne.s32.totalorder %s138, %s152
    %p154 = scmp.eq.s32.totalorder %s23, 0
    %p155 = por %p153, %p154
    %s157 = sadd.s32 %s156, 1
    %p160 = scmp.eq.s32.totalorder %s17, 1
    %p161 = scmp.ne.s32.totalorder %s156, %s158
    %p162 = scmp.eq.s32.totalorder %s17, 0
    %p163 = por %p161, %p162
    %p164 = scmp.ne.s32.totalorder %s156, %s158
    %p165 = scmp.eq.s32.totalorder %s22, 1
    %p166 = por %p164, %p165
    %p167 = scmp.ne.s32.totalorder %s158, %s159
    %p168 = scmp.eq.s32.totalorder %s22, 0
    %p169 = por %p167, %p168
    %p170 = scmp.ne.s32.totalorder %s158, %s159
    %p171 = scmp.eq.s32.totalorder %s23, 1
    %p172 = por %p170, %p171
    %p174 = scmp.ne.s32.totalorder %s159, %s173
    %p175 = scmp.eq.s32.totalorder %s23, 0
    %p176 = por %p174, %p175
    %s178 = sadd.s32 %s177, 1
    %p181 = scmp.eq.s32.totalorder %s17, 1
    %p182 = scmp.ne.s32.totalorder %s177, %s179
    %p183 = scmp.eq.s32.totalorder %s17, 0
    %p184 = por %p182, %p183
    %p185 = scmp.ne.s32.totalorder %s177, %s179
    %p186 = scmp.eq.s32.totalorder %s22, 1
    %p187 = por %p185, %p186
    %p188 = scmp.ne.s32.totalorder %s179, %s180
    %p189 = scmp.eq.s32.totalorder %s22, 0
    %p190 = por %p188, %p189
    %p191 = scmp.ne.s32.totalorder %s179, %s180
    %p192 = scmp.eq.s32.totalorder %s23, 1
    %p193 = por %p191, %p192
    %p195 = scmp.ne.s32.totalorder %s180, %s194
    %p196 = scmp.eq.s32.totalorder %s23, 0
    %p197 = por %p195, %p196
    %s199 = sadd.s32 %s198, 1
    %p202 = scmp.eq.s32.totalorder %s17, 1
    %p203 = scmp.ne.s32.totalorder %s198, %s200
    %p204 = scmp.eq.s32.totalorder %s17, 0
    %p205 = por %p203, %p204
    %p206 = scmp.ne.s32.totalorder %s198, %s200
    %p207 = scmp.eq.s32.totalorder %s22, 1
    %p208 = por %p206, %p207
    %p209 = scmp.ne.s32.totalorder %s200, %s201
    %p210 = scmp.eq.s32.totalorder %s22, 0
    %p211 = por %p209, %p210
    %p212 = scmp.ne.s32.totalorder %s200, %s201
    %p213 = scmp.eq.s32.totalorder %s23, 1
    %p214 = por %p212, %p213
    %p216 = scmp.ne.s32.totalorder %s201, %s215
    %p217 = scmp.eq.s32.totalorder %s23, 0
    %p218 = por %p216, %p217
    %s220 = sadd.s32 %s219, 1
    %p223 = scmp.eq.s32.totalorder %s17, 1
    %p224 = scmp.ne.s32.totalorder %s219, %s221
    %p225 = scmp.eq.s32.totalorder %s17, 0
    %p226 = por %p224, %p225
    %p227 = scmp.ne.s32.totalorder %s219, %s221
    %p228 = scmp.eq.s32.totalorder %s22, 1
    %p229 = por %p227, %p228
    %p230 = scmp.ne.s32.totalorder %s221, %s222
    %p231 = scmp.eq.s32.totalorder %s22, 0
    %p232 = por %p230, %p231
    %p233 = scmp.ne.s32.totalorder %s221, %s222
    %p234 = scmp.eq.s32.totalorder %s23, 1
    %p235 = por %p233, %p234
    %p237 = scmp.ne.s32.totalorder %s222, %s236
    %p238 = scmp.eq.s32.totalorder %s23, 0
    %p239 = por %p237, %p238
    %s241 = sadd.s32 %s240, 1
    %p244 = scmp.eq.s32.totalorder %s17, 1
    %p245 = scmp.ne.s32.totalorder %s240, %s242
    %p246 = scmp.eq.s32.totalorder %s17, 0
    %p247 = por %p245, %p246
    %p248 = scmp.ne.s32.totalorder %s240, %s242
    %p249 = scmp.eq.s32.totalorder %s22, 1
    %p250 = por %p248, %p249
    %p251 = scmp.ne.s32.totalorder %s242, %s243
    %p252 = scmp.eq.s32.totalorder %s22, 0
    %p253 = por %p251, %p252
    %p254 = scmp.ne.s32.totalorder %s242, %s243
    %p255 = scmp.eq.s32.totalorder %s23, 1
    %p256 = por %p254, %p255
    %p258 = scmp.ne.s32.totalorder %s243, %s257
    %p259 = scmp.eq.s32.totalorder %s23, 0
    %p260 = por %p258, %p259
    %s261 = ssub.s32 %s17, %s24
    %p262 = scmp.eq.s32.totalorder %s261, 0
    %s264 = sadd.s32 %s263, 1
    %s265 = scalar_select %p262, %s263, %s264
    %p268 = pneg %p262
    %p269 = scmp.eq.s32.totalorder %s17, 1
    %p270 = por %p268, %p269
    %p271 = scmp.ne.s32.totalorder %s263, %s266
    %p272 = scmp.eq.s32.totalorder %s17, 0
    %p273 = por %p271, %p272
    %p274 = scmp.ne.s32.totalorder %s263, %s266
    %p275 = scmp.eq.s32.totalorder %s22, 1
    %p276 = por %p274, %p275
    %p277 = scmp.ne.s32.totalorder %s266, %s267
    %p278 = scmp.eq.s32.totalorder %s22, 0
    %p279 = por %p277, %p278
    %p280 = scmp.ne.s32.totalorder %s266, %s267
    %p281 = scmp.eq.s32.totalorder %s23, 1
    %p282 = por %p280, %p281
    %p284 = scmp.ne.s32.totalorder %s267, %s283
    %p285 = scmp.eq.s32.totalorder %s23, 0
    %p286 = por %p284, %p285
    %p287 = scmp.le.s32.totalorder 1, %s17
    %p288 = scmp.lt.s32.totalorder %s17, 3
    %p289 = pnand %p287, %p288
    %p290 = pneg %p289
    // Predicated region
    $region9: #{ssl_conv_pred_forward.2} parent=5 // pred_check
      _
    $region10: #{ssl_conv_pred_forward.2} parent=5 // pred_check_branch
      %292 = sbr.rel (%p289) target = $region12
    $region11: #{ssl_conv_pred_forward.2} parent=5 // pred_region
      %s293 = ssub.s32 %s17, 1
      // Predicated region
      $region13: #{ssl_conv_pred_forward.2} parent=11 // pred_check
        %p294 = pneg %p64
      $region14: #{ssl_conv_pred_forward.2} parent=11 // pred_check_branch
        %296 = sbr.rel (%p294) target = $region16
      $region15: #{ssl_conv_pred_forward.2} parent=11 // pred_region
        _
      $region16: #{ssl_conv_pred_forward.2} parent=11 // pred_fallthru
        _
      // Predicated region
      $region17: #{ssl_conv_pred_forward.2} parent=11 // pred_check
        %p297 = pneg %p85
      $region18: #{ssl_conv_pred_forward.2} parent=11 // pred_check_branch
        %299 = sbr.rel (%p297) target = $region20
      $region19: #{ssl_conv_pred_forward.2} parent=11 // pred_region
        _
      $region20: #{ssl_conv_pred_forward.2} parent=11 // pred_fallthru
        _
      // Predicated region
      $region21: #{ssl_conv_pred_forward.2} parent=11 // pred_check
        %p300 = pneg %p106
      $region22: #{ssl_conv_pred_forward.2} parent=11 // pred_check_branch
        %302 = sbr.rel (%p300) target = $region24
      $region23: #{ssl_conv_pred_forward.2} parent=11 // pred_region
        _
      $region24: #{ssl_conv_pred_forward.2} parent=11 // pred_fallthru
        _
      // Predicated region
      $region25: #{ssl_conv_pred_forward.2} parent=11 // pred_check
        %p303 = pneg %p127
      $region26: #{ssl_conv_pred_forward.2} parent=11 // pred_check_branch
        %305 = sbr.rel (%p303) target = $region28
      $region27: #{ssl_conv_pred_forward.2} parent=11 // pred_region
        _
      $region28: #{ssl_conv_pred_forward.2} parent=11 // pred_fallthru
        _
      // Predicated region
      $region29: #{ssl_conv_pred_forward.2} parent=11 // pred_check
        %p306 = pneg %p148
      $region30: #{ssl_conv_pred_forward.2} parent=11 // pred_check_branch
        %308 = sbr.rel (%p306) target = $region32
      $region31: #{ssl_conv_pred_forward.2} parent=11 // pred_region
        _
      $region32: #{ssl_conv_pred_forward.2} parent=11 // pred_fallthru
        _
      // Predicated region
      $region33: #{ssl_conv_pred_forward.2} parent=11 // pred_check
        %p309 = pneg %p169
      $region34: #{ssl_conv_pred_forward.2} parent=11 // pred_check_branch
        %311 = sbr.rel (%p309) target = $region36
      $region35: #{ssl_conv_pred_forward.2} parent=11 // pred_region
        _
      $region36: #{ssl_conv_pred_forward.2} parent=11 // pred_fallthru
        _
      // Predicated region
      $region37: #{ssl_conv_pred_forward.2} parent=11 // pred_check
        %p312 = pneg %p190
      $region38: #{ssl_conv_pred_forward.2} parent=11 // pred_check_branch
        %314 = sbr.rel (%p312) target = $region40
      $region39: #{ssl_conv_pred_forward.2} parent=11 // pred_region
        _
      $region40: #{ssl_conv_pred_forward.2} parent=11 // pred_fallthru
        _
      // Predicated region
      $region41: #{ssl_conv_pred_forward.2} parent=11 // pred_check
        %p315 = pneg %p211
      $region42: #{ssl_conv_pred_forward.2} parent=11 // pred_check_branch
        %317 = sbr.rel (%p315) target = $region44
      $region43: #{ssl_conv_pred_forward.2} parent=11 // pred_region
        _
      $region44: #{ssl_conv_pred_forward.2} parent=11 // pred_fallthru
        _
      // Predicated region
      $region45: #{ssl_conv_pred_forward.2} parent=11 // pred_check
        %p318 = pneg %p232
      $region46: #{ssl_conv_pred_forward.2} parent=11 // pred_check_branch
        %320 = sbr.rel (%p318) target = $region48
      $region47: #{ssl_conv_pred_forward.2} parent=11 // pred_region
        _
      $region48: #{ssl_conv_pred_forward.2} parent=11 // pred_fallthru
        _
      // Predicated region
      $region49: #{ssl_conv_pred_forward.2} parent=11 // pred_check
        %p321 = pneg %p253
      $region50: #{ssl_conv_pred_forward.2} parent=11 // pred_check_branch
        %323 = sbr.rel (%p321) target = $region52
      $region51: #{ssl_conv_pred_forward.2} parent=11 // pred_region
        _
      $region52: #{ssl_conv_pred_forward.2} parent=11 // pred_fallthru
        _
    $region12: #{ssl_conv_pred_forward.2} parent=5 // pred_fallthru
      _
    %p324 = scmp.lt.s32.totalorder %s17, 2
    // Predicated region
    $region53: #{ssl_conv_pred_forward.2} parent=5 // pred_check
      %p325 = pneg %p324
    $region54: #{ssl_conv_pred_forward.2} parent=5 // pred_check_branch
      %327 = sbr.rel (%p325) target = $region56
    $region55: #{ssl_conv_pred_forward.2} parent=5 // pred_region
      // Predicated region
      $region57: #{ssl_conv_pred_forward.2} parent=55 // pred_check
        %p328 = pneg %p37
      $region58: #{ssl_conv_pred_forward.2} parent=55 // pred_check_branch
        %330 = sbr.rel (%p328) target = $region60
      $region59: #{ssl_conv_pred_forward.2} parent=55 // pred_region
        %p331 = scmp.lt.s32.totalorder %s17, 1
        %s332 = scalar_select %p331, %s17, 1
        %s333 = scalar_lea.vmem %s0, %s332
      $region60: #{ssl_conv_pred_forward.2} parent=55 // pred_fallthru
        _
    $region56: #{ssl_conv_pred_forward.2} parent=5 // pred_fallthru
      _
    %p334 = scmp.le.s32.totalorder 1, %s17
    %p335 = scmp.lt.s32.totalorder %s17, 3
    %p336 = pnand %p334, %p335
    %p337 = pneg %p336
    // Predicated region
    $region61: #{ssl_conv_pred_forward.2} parent=5 // pred_check
      _
    $region62: #{ssl_conv_pred_forward.2} parent=5 // pred_check_branch
      %339 = sbr.rel (%p336) target = $region64
    $region63: #{ssl_conv_pred_forward.2} parent=5 // pred_region
      %s340 = ssub.s32 %s17, 1
      %p341 = scmp.lt.s32.totalorder %s22, 1
      %s342 = scalar_select %p341, %s22, 1
      %s343 = scalar_lea.vmem %s0, %s342
      %p344 = pneg %p43
      %p345 = pneg %p40
      %p346 = pneg %p64
      %p347 = pneg %p61
      %p348 = pneg %p85
      %p349 = pneg %p82
      %p350 = pneg %p106
      %p351 = pneg %p103
      %p352 = pneg %p127
      %p353 = pneg %p124
      %p354 = pneg %p148
      %p355 = pneg %p145
      %p356 = pneg %p169
      %p357 = pneg %p166
      %p358 = pneg %p190
      %p359 = pneg %p187
      %p360 = pneg %p211
      %p361 = pneg %p208
      %p362 = pneg %p232
      %p363 = pneg %p229
      %p364 = pneg %p253
      %p365 = pneg %p250
      %p366 = pneg %p279
      %p367 = pneg %p276
      %p368 = scmp.lt.s32.totalorder %s22, 1
      %s369 = scalar_select %p368, %s22, 1
      %s370 = smul.addr %s369, 2
      %s371 = smul.addr %s370, 8
      %s372 = scalar_lea.vmem %s11, %s371
      %p373 = scmp.lt.s32.totalorder %s22, 1
      %s374 = scalar_select %p373, %s22, 1
      %s375 = scalar_lea.vmem %s0, %s374
      %p376 = scmp.lt.s32.totalorder %s22, 1
      %s377 = scalar_select %p376, %s22, 1
      %s378 = smul.addr %s377, 2
      %s379 = smul.addr %s378, 8
      %s380 = scalar_lea.vmem %s11, %s379
      %v382 = vld [vmem:[%s375] sm:$0x1]
      %v383 = vld [vmem:[%s1] sm:$0xf]
      %v384 = vld [vmem:[%s2] sm:$0xff]
      %v387 = vunpack.c.l.s4 1966171168
      %v388 = vunpack.c.0.s8 %v387
      %v389 = vlaneseq
      %v390 = vshrl.u32 %v389, 7
      %v391 = vsub.s32 %v388, %v390
      %v392 = vrot.slane %v382, %v391
      %v394 = vunpack.c.l.s4 1966171168
      %v395 = vunpack.c.0.s8 %v394
      %v396 = vlaneseq
      %v397 = vshrl.u32 %v396, 7
      %v398 = vsub.s32 %v395, %v397
      %v399 = vrot.slane %v392, %v398
      %v401 = vshll.u32 %v399, 16
      %403 = vrot.lane.b32.xlu0 %v401, 127
      %v404 = vpop.permute.xlu0 %403
      %v406 = vcombine.low %v382, %v382
      %v408 = vunpack.c.l.s4 1966171168
      %v409 = vunpack.c.0.s8 %v408
      %v410 = vlaneseq
      %v411 = vshrl.u32 %v410, 7
      %v412 = vsub.s32 %v409, %v411
      %v413 = vrot.slane %v406, %v412
      %v415 = vunpack.c.l.s4 1966171168
      %v416 = vunpack.c.0.s8 %v415
      %v417 = vlaneseq
      %v418 = vshrl.u32 %v417, 7
      %v419 = vsub.s32 %v416, %v418
      %v420 = vrot.slane %v413, %v419
      %421 = vrot.lane.b32.xlu0 %v420, 126
      %v422 = vpop.permute.xlu0 %421
      %v423 = vrot.slane %v401, 7
      %424 = vrot.lane.b32.xlu0 %v423, 125
      %v425 = vpop.permute.xlu0 %424
      %v427 = vcombine.low %v392, %v392
      %v429 = vunpack.c.l.s4 1966171168
      %v430 = vunpack.c.0.s8 %v429
      %v431 = vlaneseq
      %v432 = vshrl.u32 %v431, 7
      %v433 = vsub.s32 %v430, %v432
      %v434 = vrot.slane %v427, %v433
      %435 = vrot.lane.b32.xlu0 %v434, 124
      %v436 = vpop.permute.xlu0 %435
      %vm437 = vcmask 1040384
      %vm438 = vsmask.f32 256
      %vm439 = vmand %vm437, %vm438
      %v440 = vsel %vm439, %v382, %v404
      %vm441 = vcmask 1040384
      %v444 = vsel %vm441, %v440, %v422
      %vm446 = vcmask 1041408
      %vm447 = vsmask.f32 1280
      %vm448 = vmand %vm446, %vm447
      %v449 = vsel %vm448, %v444, %v425
      %vm450 = vcmask 1041408
      %v453 = vsel %vm450, %v449, %v436
      %455 = vset.pattern.permute.xlu0 0
      %456 = vperm.xlu0 %455, %v384
      %v457 = vpop.permute.xlu0 %456
      %vm459 = vcmask 39936
      %v461 = vsel %vm459, %v383, 0
      %vm463 = vcmask 1042432
      %v464 = vsel %vm450, 4294967295, 65535
      %v465 = vsel %vm463, %v464, 0
      %v466 = vand.u32 %v453, %v465
      %468 = vmatprep.subr.bf16.mxu0 0
      %469 = vmatpush1.bf16.msra.mxu0 %v466
      %470 = vmatprep.subr.bf16.mxu0 0
      %471 = vmatpush1.bf16.msra.mxu0 0
      %472 = vmatprep.subr.bf16.mxu0 0
      %473 = vmatpush1.bf16.msra.mxu0 0
      %474 = vmatprep.subr.bf16.mxu0 0
      %475 = vmatpush1.bf16.msra.mxu0 0
      %476 = vmatprep.subr.bf16.mxu0 0
      %477 = vmatpush1.bf16.msra.mxu0 0
      %478 = vmatprep.subr.bf16.mxu0 0
      %479 = vmatpush1.bf16.msra.mxu0 0
      %480 = vmatprep.subr.bf16.mxu0 0
      %481 = vmatpush1.bf16.msra.mxu0 0
      %482 = vmatprep.subr.bf16.mxu0 0
      %483 = vmatpush1.bf16.msra.mxu0 0
      %484 = vmatprep.subr.bf16.mxu0 0
      %485 = vmatpush1.bf16.msra.mxu0 0
      %486 = vmatprep.subr.bf16.mxu0 0
      %487 = vmatpush1.bf16.msra.mxu0 0
      %488 = vmatprep.subr.bf16.mxu0 0
      %489 = vmatpush1.bf16.msra.mxu0 0
      %490 = vmatprep.subr.bf16.mxu0 0
      %491 = vmatpush1.bf16.msra.mxu0 0
      %492 = vmatprep.subr.bf16.mxu0 0
      %493 = vmatpush1.bf16.msra.mxu0 0
      %494 = vmatprep.subr.bf16.mxu0 0
      %495 = vmatpush1.bf16.msra.mxu0 0
      %496 = vmatprep.subr.bf16.mxu0 0
      %497 = vmatpush1.bf16.msra.mxu0 0
      %498 = vmatprep.subr.bf16.mxu0 0
      %499 = vmatpush1.bf16.msra.mxu0 0
      %500 = vmatprep.mubr.bf16.mxu0 0
      %501 = vmatmul.mubr.bf16.gmra.mrb[0].mxu0 %v461
      %v502 = vpop.f32.mrb[0].mxu0
      %v503 = vadd.f32 %v457, %v502
      %v504 = vpop.f32.mrb[0].mxu0
      %v505 = vpop.f32.mrb[0].mxu0
      %v506 = vpop.f32.mrb[0].mxu0
      %507 = vdwg.mxu0
      %v508 = vmax.f32 %v503, 0.0
      %v509 = vpack.c.bf16 %v508, %v508
      %v510 = vld [vmem:[%s3] sm:$0xf]
      %v511 = vld [vmem:[%s4] sm:$0xff]
      %v513 = vrot.slane %v509, 4
      %514 = vrot.lane.b32.xlu0 %v513, 127
      %v515 = vpop.permute.xlu0 %514
      %516 = vrot.lane.b32.xlu0 %v509, 126
      %v517 = vpop.permute.xlu0 %516
      %518 = vrot.lane.b32.xlu0 %v513, 125
      %v519 = vpop.permute.xlu0 %518
      %520 = vrot.lane.b32.xlu0 %v509, 124
      %v521 = vpop.permute.xlu0 %520
      %vm522 = vcmask 1043456
      %v525 = vsel %vm522, %v509, %v515
      %v529 = vsel %vm522, %v517, %v519
      %532 = vset.pattern.permute.xlu0 0
      %533 = vperm.xlu0 %532, %v511
      %v534 = vpop.permute.xlu0 %533
      %vm536 = vcmask 326656
      %v538 = vsel %vm536, %v510, 0
      %v541 = vsel %vm522, %v521, 0
      %543 = vmatprep.subr.bf16.mxu0 0
      %544 = vmatpush1.bf16.msra.mxu0 %v525
      %545 = vmatprep.subr.bf16.mxu0 0
      %546 = vmatpush1.bf16.msra.mxu0 %v529
      %547 = vmatprep.subr.bf16.mxu0 0
      %548 = vmatpush1.bf16.msra.mxu0 %v541
      %549 = vmatprep.subr.bf16.mxu0 0
      %550 = vmatpush1.bf16.msra.mxu0 0
      %551 = vmatprep.subr.bf16.mxu0 0
      %552 = vmatpush1.bf16.msra.mxu0 0
      %553 = vmatprep.subr.bf16.mxu0 0
      %554 = vmatpush1.bf16.msra.mxu0 0
      %555 = vmatprep.subr.bf16.mxu0 0
      %556 = vmatpush1.bf16.msra.mxu0 0
      %557 = vmatprep.subr.bf16.mxu0 0
      %558 = vmatpush1.bf16.msra.mxu0 0
      %559 = vmatprep.subr.bf16.mxu0 0
      %560 = vmatpush1.bf16.msra.mxu0 0
      %561 = vmatprep.subr.bf16.mxu0 0
      %562 = vmatpush1.bf16.msra.mxu0 0
      %563 = vmatprep.subr.bf16.mxu0 0
      %564 = vmatpush1.bf16.msra.mxu0 0
      %565 = vmatprep.subr.bf16.mxu0 0
      %566 = vmatpush1.bf16.msra.mxu0 0
      %567 = vmatprep.subr.bf16.mxu0 0
      %568 = vmatpush1.bf16.msra.mxu0 0
      %569 = vmatprep.subr.bf16.mxu0 0
      %570 = vmatpush1.bf16.msra.mxu0 0
      %571 = vmatprep.subr.bf16.mxu0 0
      %572 = vmatpush1.bf16.msra.mxu0 0
      %573 = vmatprep.subr.bf16.mxu0 0
      %574 = vmatpush1.bf16.msra.mxu0 0
      %575 = vmatprep.mubr.bf16.mxu0 0
      %576 = vmatmul.mubr.bf16.gmra.mrb[0].mxu0 %v538
      %v577 = vpop.f32.mrb[0].mxu0
      %v578 = vadd.f32 %v534, %v577
      %v579 = vpop.f32.mrb[0].mxu0
      %v580 = vpop.f32.mrb[0].mxu0
      %v581 = vpop.f32.mrb[0].mxu0
      %582 = vdwg.mxu0
      %v583 = vmax.f32 %v578, 0.0
      %585 = vrot.lane.b32.xlu0 %v583, 127
      %v586 = vpop.permute.xlu0 %585
      %v588 = vmax.f32 %v583, %v586
      %590 = vrot.lane.b32.xlu0 %v588, 126
      %v591 = vpop.permute.xlu0 %590
      %v593 = vmax.f32 %v588, %v591
      %v594 = vld [vmem:[%s5] sm:$0xf]
      %v595 = vld [vmem:[%s5 + $0x4] sm:$0xf]
      %v596 = vld [vmem:[%s5 + $0x8] sm:$0xf]
      %v597 = vld [vmem:[%s5 + $0xc] sm:$0xf]
      %v598 = vld [vmem:[%s5 + $0x10] sm:$0xf]
      %v599 = vld [vmem:[%s5 + $0x14] sm:$0xf]
      %v600 = vld [vmem:[%s5 + $0x18] sm:$0x7]
      %v601 = vpack.c.bf16 %v593, %v593
      %v609 = vunpack.c.l.b16 %v594
      %v610 = vunpack.c.l.b16 %v595
      %v611 = vunpack.c.l.b16 %v596
      %v612 = vunpack.c.l.b16 %v597
      %v613 = vunpack.c.l.b16 %v598
      %v614 = vunpack.c.l.b16 %v599
      %v615 = vunpack.c.l.b16 %v600
      %v616 = vpack.c.b16 %v610, %v609
      %v617 = vpack.c.b16 %v612, %v611
      %v618 = vpack.c.b16 %v614, %v613
      %v619 = vpack.c.b16 %v615, %v615
      %vm623 = vcmask 433152
      %v625 = vsel %vm623, %v601, 0
      %v628 = vand.u32 %v619, %v465
      %630 = vmatprep.subr.bf16.mxu0 0
      %631 = vmatpush1.bf16.msra.mxu0 %v616
      %632 = vmatprep.subr.bf16.mxu0 0
      %633 = vmatpush1.bf16.msra.mxu0 %v617
      %634 = vmatprep.subr.bf16.mxu0 0
      %635 = vmatpush1.bf16.msra.mxu0 %v618
      %636 = vmatprep.subr.bf16.mxu0 0
      %637 = vmatpush1.bf16.msra.mxu0 %v628
      %638 = vmatprep.subr.bf16.mxu0 0
      %639 = vmatpush1.bf16.msra.mxu0 0
      %640 = vmatprep.subr.bf16.mxu0 0
      %641 = vmatpush1.bf16.msra.mxu0 0
      %642 = vmatprep.subr.bf16.mxu0 0
      %643 = vmatpush1.bf16.msra.mxu0 0
      %644 = vmatprep.subr.bf16.mxu0 0
      %645 = vmatpush1.bf16.msra.mxu0 0
      %646 = vmatprep.subr.bf16.mxu0 0
      %647 = vmatpush1.bf16.msra.mxu0 0
      %648 = vmatprep.subr.bf16.mxu0 0
      %649 = vmatpush1.bf16.msra.mxu0 0
      %650 = vmatprep.subr.bf16.mxu0 0
      %651 = vmatpush1.bf16.msra.mxu0 0
      %652 = vmatprep.subr.bf16.mxu0 0
      %653 = vmatpush1.bf16.msra.mxu0 0
      %654 = vmatprep.subr.bf16.mxu0 0
      %655 = vmatpush1.bf16.msra.mxu0 0
      %656 = vmatprep.subr.bf16.mxu0 0
      %657 = vmatpush1.bf16.msra.mxu0 0
      %658 = vmatprep.subr.bf16.mxu0 0
      %659 = vmatpush1.bf16.msra.mxu0 0
      %660 = vmatprep.subr.bf16.mxu0 0
      %661 = vmatpush1.bf16.msra.mxu0 0
      %662 = vmatprep.mubr.bf16.mxu0 0
      %663 = vmatmul.mubr.bf16.gmra.mrb[0].mxu0 %v625
      %v664 = vpop.f32.mrb[0].mxu0
      %v665 = vadd.f32 0.0, %v664
      %v666 = vpop.f32.mrb[0].mxu0
      %v667 = vpop.f32.mrb[0].mxu0
      %v668 = vpop.f32.mrb[0].mxu0
      %669 = vdwg.mxu0
      %v670 = vpack.c.bf16 %v665, %v665
      %v671 = vld [vmem:[%s6] sm:$0xf]
      %v672 = vld [vmem:[%s6 + $0x4] sm:$0xf]
      %v673 = vld [vmem:[%s7] sm:$0xff]
      %v674 = vld [vmem:[%s7 + $0x8] sm:$0xff]
      %v676 = vrot.slane %v670, 4
      %677 = vrot.lane.b32.xlu0 %v676, 127
      %v678 = vpop.permute.xlu0 %677
      %679 = vrot.lane.b32.xlu0 %v670, 126
      %v680 = vpop.permute.xlu0 %679
      %v683 = vsel %vm522, %v670, %v678
      %686 = vset.pattern.permute.xlu0 0
      %687 = vperm.xlu0 %686, %v673
      %v688 = vpop.permute.xlu0 %687
      %691 = vset.pattern.permute.xlu0 0
      %692 = vperm.xlu0 %691, %v674
      %v693 = vpop.permute.xlu0 %692
      %v697 = vunpack.c.l.b16 %v671
      %v698 = vunpack.c.l.b16 %v672
      %v699 = vpack.c.b16 %v698, %v697
      %vm700 = vcmask 195584
      %v702 = vsel %vm700, %v699, 0
      %v705 = vsel %vm522, %v680, 0
      %707 = vmatprep.subr.bf16.mxu0 0
      %708 = vmatpush1.bf16.msra.mxu0 %v683
      %709 = vmatprep.subr.bf16.mxu0 0
      %710 = vmatpush1.bf16.msra.mxu0 %v705
      %711 = vmatprep.subr.bf16.mxu0 0
      %712 = vmatpush1.bf16.msra.mxu0 0
      %713 = vmatprep.subr.bf16.mxu0 0
      %714 = vmatpush1.bf16.msra.mxu0 0
      %715 = vmatprep.subr.bf16.mxu0 0
      %716 = vmatpush1.bf16.msra.mxu0 0
      %717 = vmatprep.subr.bf16.mxu0 0
      %718 = vmatpush1.bf16.msra.mxu0 0
      %719 = vmatprep.subr.bf16.mxu0 0
      %720 = vmatpush1.bf16.msra.mxu0 0
      %721 = vmatprep.subr.bf16.mxu0 0
      %722 = vmatpush1.bf16.msra.mxu0 0
      %723 = vmatprep.subr.bf16.mxu0 0
      %724 = vmatpush1.bf16.msra.mxu0 0
      %725 = vmatprep.subr.bf16.mxu0 0
      %726 = vmatpush1.bf16.msra.mxu0 0
      %727 = vmatprep.subr.bf16.mxu0 0
      %728 = vmatpush1.bf16.msra.mxu0 0
      %729 = vmatprep.subr.bf16.mxu0 0
      %730 = vmatpush1.bf16.msra.mxu0 0
      %731 = vmatprep.subr.bf16.mxu0 0
      %732 = vmatpush1.bf16.msra.mxu0 0
      %733 = vmatprep.subr.bf16.mxu0 0
      %734 = vmatpush1.bf16.msra.mxu0 0
      %735 = vmatprep.subr.bf16.mxu0 0
      %736 = vmatpush1.bf16.msra.mxu0 0
      %737 = vmatprep.subr.bf16.mxu0 0
      %738 = vmatpush1.bf16.msra.mxu0 0
      %739 = vmatprep.mubr.bf16.mxu0 0
      %740 = vmatmul.mubr.bf16.gmra.mrb[0].mxu0 %v702
      %v741 = vpop.f32.mrb[0].mxu0
      %v742 = vadd.f32 %v688, %v741
      %v743 = vpop.f32.mrb[0].mxu0
      %v744 = vpop.f32.mrb[0].mxu0
      %v745 = vadd.f32 %v693, %v744
      %v746 = vpop.f32.mrb[0].mxu0
      %747 = vdwg.mxu0
      %v748 = vmax.f32 %v742, 0.0
      %v749 = vmax.f32 %v745, 0.0
      %v750 = vpack.c.bf16 %v749, %v748
      %v751 = vld [vmem:[%s8] sm:$0xf]
      %v752 = vld [vmem:[%s8 + $0x4] sm:$0xf]
      %v753 = vld [vmem:[%s9] sm:$0xff]
      %v754 = vld [vmem:[%s9 + $0x8] sm:$0xff]
      %756 = vrot.lane.b32.xlu0 %v750, 127
      %v757 = vpop.permute.xlu0 %756
      %759 = vrot.lane.b32.xlu0 %v750, 126
      %v760 = vpop.permute.xlu0 %759
      %763 = vset.pattern.permute.xlu0 0
      %764 = vperm.xlu0 %763, %v753
      %v765 = vpop.permute.xlu0 %764
      %768 = vset.pattern.permute.xlu0 0
      %769 = vperm.xlu0 %768, %v754
      %v770 = vpop.permute.xlu0 %769
      %v774 = vunpack.c.l.b16 %v751
      %v775 = vunpack.c.l.b16 %v752
      %v776 = vpack.c.b16 %v775, %v774
      %vm777 = vcmask 392192
      %v779 = vsel %vm777, %v776, 0
      %781 = vmatprep.subr.bf16.mxu0 0
      %782 = vmatpush1.bf16.msra.mxu0 %v750
      %783 = vmatprep.subr.bf16.mxu0 0
      %784 = vmatpush1.bf16.msra.mxu0 %v757
      %785 = vmatprep.subr.bf16.mxu0 0
      %786 = vmatpush1.bf16.msra.mxu0 %v760
      %787 = vmatprep.subr.bf16.mxu0 0
      %788 = vmatpush1.bf16.msra.mxu0 0
      %789 = vmatprep.subr.bf16.mxu0 0
      %790 = vmatpush1.bf16.msra.mxu0 0
      %791 = vmatprep.subr.bf16.mxu0 0
      %792 = vmatpush1.bf16.msra.mxu0 0
      %793 = vmatprep.subr.bf16.mxu0 0
      %794 = vmatpush1.bf16.msra.mxu0 0
      %795 = vmatprep.subr.bf16.mxu0 0
      %796 = vmatpush1.bf16.msra.mxu0 0
      %797 = vmatprep.subr.bf16.mxu0 0
      %798 = vmatpush1.bf16.msra.mxu0 0
      %799 = vmatprep.subr.bf16.mxu0 0
      %800 = vmatpush1.bf16.msra.mxu0 0
      %801 = vmatprep.subr.bf16.mxu0 0
      %802 = vmatpush1.bf16.msra.mxu0 0
      %803 = vmatprep.subr.bf16.mxu0 0
      %804 = vmatpush1.bf16.msra.mxu0 0
      %805 = vmatprep.subr.bf16.mxu0 0
      %806 = vmatpush1.bf16.msra.mxu0 0
      %807 = vmatprep.subr.bf16.mxu0 0
      %808 = vmatpush1.bf16.msra.mxu0 0
      %809 = vmatprep.subr.bf16.mxu0 0
      %810 = vmatpush1.bf16.msra.mxu0 0
      %811 = vmatprep.subr.bf16.mxu0 0
      %812 = vmatpush1.bf16.msra.mxu0 0
      %813 = vmatprep.mubr.bf16.mxu0 0
      %814 = vmatmul.mubr.bf16.gmra.mrb[0].mxu0 %v779
      %v815 = vpop.f32.mrb[0].mxu0
      %v816 = vadd.f32 %v765, %v815
      %v817 = vpop.f32.mrb[0].mxu0
      %v818 = vpop.f32.mrb[0].mxu0
      %v819 = vadd.f32 %v770, %v818
      %v820 = vpop.f32.mrb[0].mxu0
      %821 = vdwg.mxu0
      %v822 = vmax.f32 %v816, 0.0
      %v823 = vmax.f32 %v819, 0.0
      %826 = vrot.lane.b32.xlu0 %v822, 127
      %v827 = vpop.permute.xlu0 %826
      %828 = vrot.lane.b32.xlu0 %v823, 127
      %v829 = vpop.permute.xlu0 %828
      %v832 = vmax.f32 %v822, %v827
      %v833 = vmax.f32 %v823, %v829
      %836 = vrot.lane.b32.xlu0 %v832, 126
      %v837 = vpop.permute.xlu0 %836
      %838 = vrot.lane.b32.xlu0 %v833, 126
      %v839 = vpop.permute.xlu0 %838
      %v842 = vmax.f32 %v832, %v837
      %v843 = vmax.f32 %v833, %v839
      %v844 = vld [vmem:[%s10] sm:$0xf]
      %v845 = vld [vmem:[%s10 + $0x4] sm:$0xf]
      %v846 = vld [vmem:[%s10 + $0x8] sm:$0x3]
      %v847 = vpack.c.bf16 %v843, %v842
      %v851 = vunpack.c.l.b16 %v844
      %v852 = vunpack.c.l.b16 %v845
      %v853 = vunpack.c.l.b16 %v846
      %v854 = vpack.c.b16 %v852, %v851
      %v855 = vpack.c.b16 %v853, %v853
      %vm857 = vcmask 162816
      %v859 = vsel %vm857, %v847, 0
      %v862 = vsel %vm450, %v855, 0
      %864 = vmatprep.subr.bf16.mxu0 0
      %865 = vmatpush1.bf16.msra.mxu0 %v854
      %866 = vmatprep.subr.bf16.mxu0 0
      %867 = vmatpush1.bf16.msra.mxu0 %v862
      %868 = vmatprep.subr.bf16.mxu0 0
      %869 = vmatpush1.bf16.msra.mxu0 0
      %870 = vmatprep.subr.bf16.mxu0 0
      %871 = vmatpush1.bf16.msra.mxu0 0
      %872 = vmatprep.subr.bf16.mxu0 0
      %873 = vmatpush1.bf16.msra.mxu0 0
      %874 = vmatprep.subr.bf16.mxu0 0
      %875 = vmatpush1.bf16.msra.mxu0 0
      %876 = vmatprep.subr.bf16.mxu0 0
      %877 = vmatpush1.bf16.msra.mxu0 0
      %878 = vmatprep.subr.bf16.mxu0 0
      %879 = vmatpush1.bf16.msra.mxu0 0
      %880 = vmatprep.subr.bf16.mxu0 0
      %881 = vmatpush1.bf16.msra.mxu0 0
      %882 = vmatprep.subr.bf16.mxu0 0
      %883 = vmatpush1.bf16.msra.mxu0 0
      %884 = vmatprep.subr.bf16.mxu0 0
      %885 = vmatpush1.bf16.msra.mxu0 0
      %886 = vmatprep.subr.bf16.mxu0 0
      %887 = vmatpush1.bf16.msra.mxu0 0
      %888 = vmatprep.subr.bf16.mxu0 0
      %889 = vmatpush1.bf16.msra.mxu0 0
      %890 = vmatprep.subr.bf16.mxu0 0
      %891 = vmatpush1.bf16.msra.mxu0 0
      %892 = vmatprep.subr.bf16.mxu0 0
      %893 = vmatpush1.bf16.msra.mxu0 0
      %894 = vmatprep.subr.bf16.mxu0 0
      %895 = vmatpush1.bf16.msra.mxu0 0
      %896 = vmatprep.mubr.bf16.mxu0 0
      %897 = vmatmul.mubr.bf16.gmra.mrb[0].mxu0 %v859
      %v898 = vpop.f32.mrb[0].mxu0
      %v899 = vadd.f32 0.0, %v898
      %v900 = vpop.f32.mrb[0].mxu0
      %v901 = vpop.f32.mrb[0].mxu0
      %v902 = vadd.f32 0.0, %v901
      %v903 = vpop.f32.mrb[0].mxu0
      %904 = vdwg.mxu0
      %vm905 = vcmask 80896
      %v906 = vsel %vm905, %v899, 0.0
      %907 = vadd.xlane.f32.xlu0 %v906
      %v908 = vpop.xlane.xlu0 %907
      %v909 = vsel %vm905, %v902, 0.0
      %910 = vadd.xlane.f32.xlu0 %v909
      %v911 = vpop.xlane.xlu0 %910
      %v912 = vrcp.pop 10.0
      %v913 = vmul.f32 %v908, %v912
      %v914 = vmul.f32 %v911, %v912
      %vm915 = vcmask 7168
      %916 = vst.msk [vmem:[%s380] sm:$0xff] %vm915, %v913
      %917 = vst.msk [vmem:[%s380 + $0x8] sm:$0xff] %vm915, %v914
      %p918 = scmp.lt.s32.totalorder %s22, 1
      %s919 = scalar_select %p918, %s22, 1
      %s920 = smul.addr %s919, 2
      %s921 = smul.addr %s920, 8
      %s922 = scalar_lea.vmem %s11, %s921
      // Predicated region
      $region65: #{ssl_conv_pred_forward.2} parent=63 // pred_check
        %p923 = pneg %p276
      $region66: #{ssl_conv_pred_forward.2} parent=63 // pred_check_branch
        %925 = sbr.rel (%p923) target = $region68
      $region67: #{ssl_conv_pred_forward.2} parent=63 // pred_region
        _
      $region68: #{ssl_conv_pred_forward.2} parent=63 // pred_fallthru
        _
    $region64: #{ssl_conv_pred_forward.2} parent=5 // pred_fallthru
      _
    %p926 = scmp.le.s32.totalorder 2, %s17
    // Predicated region
    $region69: #{ssl_conv_pred_forward.2} parent=5 // pred_check
      %p927 = pneg %p926
    $region70: #{ssl_conv_pred_forward.2} parent=5 // pred_check_branch
      %929 = sbr.rel (%p927) target = $region72
    $region71: #{ssl_conv_pred_forward.2} parent=5 // pred_region
      %s930 = ssub.s32 %s17, 2
      // Predicated region
      $region73: #{ssl_conv_pred_forward.2} parent=71 // pred_check
        %p931 = pneg %p282
      $region74: #{ssl_conv_pred_forward.2} parent=71 // pred_check_branch
        %933 = sbr.rel (%p931) target = $region76
      $region75: #{ssl_conv_pred_forward.2} parent=71 // pred_region
        %p934 = scmp.lt.s32.totalorder %s23, 1
        %s935 = scalar_select %p934, %s23, 1
        %s936 = smul.addr %s935, 2
        %s937 = smul.addr %s936, 8
        %s938 = scalar_lea.vmem %s11, %s937
      $region76: #{ssl_conv_pred_forward.2} parent=71 // pred_fallthru
        _
    $region72: #{ssl_conv_pred_forward.2} parent=5 // pred_fallthru
      _
  $region6: #{ssl_conv_pred_forward.2} parent=0 // loop_footer
    %s21 = sadd.s32 1, %s17
  $region7: #{ssl_conv_pred_forward.2} parent=0 // loop_footer_branch
    %16 = sbr.rel target = $region3
  $region8: #{ssl_conv_pred_forward.2} parent=0 // loop_exit
    _

</llo_original>
